<compile_context>
chip_gen: v6e
topology: v6e:2x2x1
jax: 0.10.0
libtpu: 0.0.40
codegen_flags: <defaults>
</compile_context>

<pallas_src>
import jax
import jax.numpy as jnp
from jax.experimental import pallas as pl
from jax.experimental.pallas import tpu as pltpu


def _round_up(x, m):
    return ((x + m - 1) // m) * m


def _vmem_capacity_bytes():
    """Per-TensorCore VMEM capacity; generation-aware fallback."""
    try:
        info = pltpu.get_tpu_info()
        cap = int(getattr(info, "vmem_capacity_bytes", 0) or 0)
        if cap > 0:
            return cap
    except Exception:
        pass
    try:
        kind = jax.devices()[0].device_kind.lower()
    except Exception:
        kind = ""
    if "v7" in kind:
        return 64 << 20           # v7x: 64 MiB per TensorCore
    if "v5" in kind or "v6" in kind:
        return 128 << 20          # v5e / v6e: 128 MiB
    return 64 << 20               # unknown: be conservative


def _pick_block_q(n, c, d_pad, vmem_cap, out_bytes=4):
    """Largest 8-aligned q-tile dividing n whose double-buffered (tq, n)
    output block fits the generation-aware output budget."""
    # ~1/4 of VMEM for the output double-buffer on 64 MiB parts (v7x),
    # ~1/3 on 128 MiB parts (v5e/v6e).  Other residents (bf16 x slab, bf16 k
    # scratch, weights) are accounted for in the explicit vmem limit.
    out_budget = vmem_cap // 4 if vmem_cap <= (64 << 20) else vmem_cap // 3
    cap_rows = max(8, out_budget // (2 * out_bytes * n))
    for cand in (2048, 1024, 512, 256, 128, 64, 32, 16, 8):
        if cand <= cap_rows and n % cand == 0:
            return cand
    return n  # small / odd H*W: a single full-extent block is always legal


# ---------------------------------------------------------------------------
# Fused kernel: per (batch, head, q-tile)
#   k   = relu(x      @ Wk)  -> bf16 VMEM scratch (once per (b, h))
#   q   = relu(x_tile @ (scale * Wq)) -> bf16
#   sim = q @ k^T (f32 acc) ; attn = softmax(sim - rowmax)
# ---------------------------------------------------------------------------
def _fused_attention_kernel(x_ref, wq_ref, wk_ref, o_ref, k_ref):
    qi = pl.program_id(2)          # q-tile index (innermost grid axis)
    tq = o_ref.shape[2]            # static tile size

    # k for this (batch, head): the x / Wk blocks do not change with qi, so
    # compute once (qi == 0) and cache in bf16 for every q-tile.
    # NOTE: correct only while the qi axis stays "arbitrary"/unsplit.
    @pl.when(qi == 0)
    def _():
        k_f32 = jnp.dot(x_ref[0], wk_ref[0],
                        preferred_element_type=jnp.float32)
        k_ref[...] = jnp.maximum(k_f32, 0.0).astype(jnp.bfloat16)

    # q-tile: slice the already-resident x slab (no duplicate xq HBM stream).
    row0 = pl.multiple_of(qi * tq, tq)
    x_tile = x_ref[0, pl.ds(row0, tq), :]                      # (tq, C) bf16
    q = jnp.maximum(
        jnp.dot(x_tile, wq_ref[0], preferred_element_type=jnp.float32),
        0.0).astype(jnp.bfloat16)                              # (tq, Dp) bf16

    # sim = q @ k^T with bf16 MXU operands, f32 accumulation; contract the
    # last dims so no explicit transpose is materialized.
    sim = jax.lax.dot_general(
        q, k_ref[...],
        dimension_numbers=(((1,), (1,)), ((), ())),
        preferred_element_type=jnp.float32)                    # (tq, N) f32

    # Row-wise softmax (each row spans the full key axis -> exact max/sum).
    m = jnp.max(sim, axis=-1, keepdims=True)
    e = jnp.exp(sim - m)
    denom = jnp.sum(e, axis=-1, keepdims=True)
    r = pl.reciprocal(denom, approx=True)
    r = r * (2.0 - denom * r)      # one Newton step -> rows sum to 1 (f32)
    o_ref[0, 0, :, :] = (e * r).astype(o_ref.dtype)


def fused_qk_attention(x, wq, wk, *, block_q=None, out_dtype=jnp.float32):
    """x: (B, N, C) bf16 channel-last; wq/wk: (heads, C, Dp) bf16 (softmax
    scale folded into wq, dim_head zero-padded to Dp).
    Returns (B, heads, N, N) in out_dtype (default f32, matching PyTorch;
    bf16 output is an interface change for bandwidth-bound callers)."""
    B, N, C = x.shape
    heads, c_w, d_pad = wq.shape
    assert c_w == C and wk.shape == (heads, C, d_pad)

    out_bytes = jnp.dtype(out_dtype).itemsize
    vmem_cap = _vmem_capacity_bytes()
    tq = block_q if block_q is not None else _pick_block_q(
        N, C, d_pad, vmem_cap, out_bytes)
    assert N % tq == 0, "block_q must divide H*W"
    grid = (B, heads, N // tq)

    # Explicit scoped-VMEM budget: residents + double-buffered output tile
    # + slack for in-kernel f32 intermediates (sim / e).
    residents = 2 * N * C * 2 + 2 * 2 * C * d_pad * 2 + N * d_pad * 2
    est = residents + 2 * tq * N * out_bytes + 3 * tq * N * 4 + (4 << 20)
    vmem_limit = int(min(max(est, 32 << 20), int(0.9 * vmem_cap)))

    def _build(single_buffer_invariants):
        # Invariant inputs: single-buffered (index constant in qi / mostly
        # constant across the grid) to save VMEM under v7x's 64 MiB ceiling.
        inv_kw = ({"pipeline_mode": pl.Buffered(1)}
                  if single_buffer_invariants else {})
        in_specs = [
            # Full-row x slab (feeds both k and the in-kernel q-tile slice);
            # block index constant in (h, qi) -> Pallas skips the re-DMA.
            pl.BlockSpec((1, N, C), lambda b, h, qi: (b, 0, 0), **inv_kw),
            pl.BlockSpec((1, C, d_pad), lambda b, h, qi: (h, 0, 0), **inv_kw),  # Wq*scale
            pl.BlockSpec((1, C, d_pad), lambda b, h, qi: (h, 0, 0), **inv_kw),  # Wk
        ]
        return pl.pallas_call(
            _fused_attention_kernel,
            out_shape=jax.ShapeDtypeStruct((B, heads, N, N), out_dtype),
            grid=grid,
            in_specs=in_specs,
            # Lane-dense (tq, N) output tile per q-tile.
            out_specs=pl.BlockSpec((1, 1, tq, N),
                                   lambda b, h, qi: (b, h, qi, 0)),
            scratch_shapes=[pltpu.VMEM((N, d_pad), jnp.bfloat16)],  # k cache
            compiler_params=pltpu.CompilerParams(
                # (b, h) parallel -> v7x megacore shards across both cores
                # (ensure B*heads >= 2); qi is "arbitrary" (k scratch carries).
                dimension_semantics=("parallel", "parallel", "arbitrary"),
                vmem_limit_bytes=vmem_limit,
            ),
        )

    try:
        return _build(True)(x, wq, wk)
    except Exception:
        # Fallback to default double-buffering if Buffered(1) is unsupported.
        return _build(False)(x, wq, wk)


# ---------------------------------------------------------------------------
# Module wrapper
# ---------------------------------------------------------------------------
class AttentionPallas:
    """Pallas TPU equivalent of models/gma.py::Attention (forward only)."""

    def __init__(self, *, dim, max_pos_size=100, heads=4, dim_head=128, key=None):
        self.heads = heads
        self.dim_head = dim_head
        self.scale = dim_head ** (-0.5)
        inner = heads * dim_head
        if key is None:
            key = jax.random.PRNGKey(42)
        # Conv2d(dim, 2*inner, 1, bias=False) weight, squeezed to (2*inner, dim).
        w = jax.random.normal(key, (2 * inner, dim), dtype=jnp.float32) * 0.05
        self.w = w  # f32 copy kept for the pure-JAX reference

        # Per-head (C, d) slabs: conv channel h*dim_head + i feeds head h, feat i.
        wq = jnp.transpose(w[:inner].reshape(heads, dim_head, dim), (0, 2, 1))
        wk = jnp.transpose(w[inner:].reshape(heads, dim_head, dim), (0, 2, 1))
        # Fold softmax scale into Wq (scale > 0 => relu(scale*q) == relu(x@(scale*Wq))).
        wq = wq * self.scale
        # Zero-pad dim_head to a lane-dense multiple of 128 (exact for q.k^T).
        # TODO(synk): for small dim_head, packing heads into one (C, heads*d)
        # projection would avoid the zero-pad MXU waste (only matters if the
        # kernel ever becomes MXU-bound).
        d_pad = _round_up(dim_head, 128)
        pad = d_pad - dim_head
        if pad:
            wq = jnp.pad(wq, ((0, 0), (0, 0), (0, pad)))
            wk = jnp.pad(wk, ((0, 0), (0, 0), (0, pad)))
        # bf16 weights: half the HBM traffic / native MXU path (f32 accumulation).
        self.wq = wq.astype(jnp.bfloat16)
        self.wk = wk.astype(jnp.bfloat16)
        # TODO(synk): RelPosEmb is instantiated by the PyTorch module but never
        # used in Attention.forward, so it is intentionally not materialized.

    def __call__(self, fmap, block_q=None, out_dtype=jnp.float32):
        # fmap: NCHW (B, C, H, W), same convention as the PyTorch module.
        B, C, H, W = fmap.shape
        N = H * W
        # NCHW -> (B, N, C) channel-last (lane-dense) slab, cast to bf16 in the
        # same XLA pass.  The 1x1-conv projection is fused into the kernel.
        x = jnp.transpose(fmap, (0, 2, 3, 1)).reshape(B, N, C).astype(jnp.bfloat16)
        return fused_qk_attention(x, self.wq, self.wk,
                                  block_q=block_q, out_dtype=out_dtype)


# ---------------------------------------------------------------------------
# Pure-JAX (f32) reference with the original PyTorch semantics
# ---------------------------------------------------------------------------
def reference_forward(fmap, w, heads, dim_head, scale):
    B, C, H, W = fmap.shape
    N = H * W
    inner = heads * dim_head
    x = jnp.transpose(fmap, (0, 2, 3, 1)).reshape(B, N, C)
    qk = x @ w.T                                                # (B, N, 2*inner)
    q = qk[..., :inner].reshape(B, N, heads, dim_head).transpose(0, 2, 1, 3)
    k = qk[..., inner:].reshape(B, N, heads, dim_head).transpose(0, 2, 1, 3)
    q = jax.nn.relu(scale * q)
    k = jax.nn.relu(k)
    sim = jnp.einsum("bhnd,bhmd->bhnm", q, k)
    sim = sim - jnp.max(sim, axis=-1, keepdims=True)
    return jax.nn.softmax(sim, axis=-1)


if __name__ == "__main__":
    # Small shapes consistent with the module's forward.
    B, dim, H, W = 2, 32, 16, 16        # N = H*W = 256
    heads, dim_head = 2, 32             # B*heads = 4 -> megacore occupancy OK

    key = jax.random.PRNGKey(0)
    k_in, k_w = jax.random.split(key)
    fmap = jax.random.normal(k_in, (B, dim, H, W), dtype=jnp.float32)

    model = AttentionPallas(dim=dim, heads=heads, dim_head=dim_head, key=k_w)

    # block_q=128 -> 2 q-tiles per (batch, head): exercises the tiled /
    # k-scratch-reuse / in-kernel q-slice path even at this small size.
    attn = model(fmap, block_q=128)
    attn = jax.block_until_ready(attn)

    ref = reference_forward(fmap, model.w, heads, dim_head, model.scale)
    assert attn.shape == (B, heads, H * W, H * W)
    # bf16 projection inputs and bf16 sim operands => loose tolerance vs the
    # pure-f32 reference path.
    assert jnp.allclose(attn, ref, rtol=2e-2, atol=3e-3), "mismatch vs reference"
    row_sums = jnp.sum(attn, axis=-1)
    assert float(jnp.max(jnp.abs(row_sums - 1.0))) < 2e-3, "softmax rows != 1"

    print("KERNEL_OK")
</pallas_src>

<mosaic_0001>
module attributes {stable_mosaic.version = 11 : i64} {
  func.func @_fused_attention_kernel(%arg0: i32, %arg1: i32, %arg2: i32, %arg3: memref<1x256x32xbf16, #tpu.memory_space<vmem>>, %arg4: memref<1x32x128xbf16, #tpu.memory_space<vmem>>, %arg5: memref<1x32x128xbf16, #tpu.memory_space<vmem>>, %arg6: memref<1x1x128x256xf32, #tpu.memory_space<vmem>>, %arg7: memref<256x128xbf16, #tpu.memory_space<vmem>>) attributes {dimension_semantics = [#tpu.dimension_semantics<parallel>, #tpu.dimension_semantics<parallel>, #tpu.dimension_semantics<arbitrary>], iteration_bounds = array<i64: 2, 2, 2>, scalar_prefetch = 0 : i64, scratch_operands = 1 : i64, tpu.core_type = #tpu.core_type<tc>, window_params = [{pipeline_mode = #tpu.pipeline_mode<synchronous>, transform_indices = @transform_0, window_bounds = array<i64: 1, 256, 32>}, {pipeline_mode = #tpu.pipeline_mode<synchronous>, transform_indices = @transform_1, window_bounds = array<i64: 1, 32, 128>}, {pipeline_mode = #tpu.pipeline_mode<synchronous>, transform_indices = @transform_2, window_bounds = array<i64: 1, 32, 128>}, {transform_indices = @transform_3, window_bounds = array<i64: 1, 1, 128, 256>}]} {
    %c0_i32 = arith.constant 0 : i32
    %0 = arith.cmpi eq, %arg2, %c0_i32 : i32
    %1 = arith.extui %0 : i1 to i32
    %c0_i32_0 = arith.constant 0 : i32
    %2 = arith.cmpi ne, %1, %c0_i32_0 : i32
    scf.if %2 {
      %c0_16 = arith.constant 0 : index
      %c0_17 = arith.constant 0 : index
      %c0_18 = arith.constant 0 : index
      %33 = vector.load %arg3[%c0_16, %c0_17, %c0_18] : memref<1x256x32xbf16, #tpu.memory_space<vmem>>, vector<1x256x32xbf16>
      %34 = vector.shape_cast %33 : vector<1x256x32xbf16> to vector<256x32xbf16>
      %c0_19 = arith.constant 0 : index
      %c0_20 = arith.constant 0 : index
      %c0_21 = arith.constant 0 : index
      %35 = vector.load %arg5[%c0_19, %c0_20, %c0_21] : memref<1x32x128xbf16, #tpu.memory_space<vmem>>, vector<1x32x128xbf16>
      %36 = vector.shape_cast %35 : vector<1x32x128xbf16> to vector<32x128xbf16>
      %cst_22 = arith.constant dense<0.000000e+00> : vector<256x128xf32>
      %37 = tpu.matmul %34, %36, %cst_22 {dimension_numbers = #tpu.dot_dimension_numbers<[1], [0], [0], [1], [0, 0, 1, 1], [], []>} : vector<256x32xbf16>, vector<32x128xbf16>, vector<256x128xf32> -> vector<256x128xf32>
      %cst_23 = arith.constant 0.000000e+00 : f32
      %38 = vector.broadcast %cst_23 : f32 to vector<256x128xf32>
      %39 = arith.maximumf %37, %38 : vector<256x128xf32>
      %40 = arith.truncf %39 : vector<256x128xf32> to vector<256x128xbf16>
      %c0_24 = arith.constant 0 : index
      %c0_25 = arith.constant 0 : index
      %41 = vector.load %arg7[%c0_24, %c0_25] : memref<256x128xbf16, #tpu.memory_space<vmem>>, vector<256x128xbf16>
      tpu.vector_store %arg7[%c0_24, %c0_25], %40 {strides = array<i32>} : memref<256x128xbf16, #tpu.memory_space<vmem>>, vector<256x128xbf16>,
    } else {
    }
    %c128_i32 = arith.constant 128 : i32
    %3 = arith.muli %arg2, %c128_i32 : i32
    %4 = tpu.assume_multiple %3, 128 : i32
    %c0 = arith.constant 0 : index
    %5 = arith.index_cast %4 : i32 to index
    %c0_1 = arith.constant 0 : index
    %6 = vector.load %arg3[%c0, %5, %c0_1] : memref<1x256x32xbf16, #tpu.memory_space<vmem>>, vector<1x128x32xbf16>
    %7 = vector.shape_cast %6 : vector<1x128x32xbf16> to vector<128x32xbf16>
    %c0_2 = arith.constant 0 : index
    %c0_3 = arith.constant 0 : index
    %c0_4 = arith.constant 0 : index
    %8 = vector.load %arg4[%c0_2, %c0_3, %c0_4] : memref<1x32x128xbf16, #tpu.memory_space<vmem>>, vector<1x32x128xbf16>
    %9 = vector.shape_cast %8 : vector<1x32x128xbf16> to vector<32x128xbf16>
    %cst = arith.constant dense<0.000000e+00> : vector<128x128xf32>
    %10 = tpu.matmul %7, %9, %cst {dimension_numbers = #tpu.dot_dimension_numbers<[1], [0], [0], [1], [0, 0, 1, 1], [], []>} : vector<128x32xbf16>, vector<32x128xbf16>, vector<128x128xf32> -> vector<128x128xf32>
    %cst_5 = arith.constant 0.000000e+00 : f32
    %11 = vector.broadcast %cst_5 : f32 to vector<128x128xf32>
    %12 = arith.maximumf %10, %11 : vector<128x128xf32>
    %13 = arith.truncf %12 : vector<128x128xf32> to vector<128x128xbf16>
    %c0_6 = arith.constant 0 : index
    %c0_7 = arith.constant 0 : index
    %14 = vector.load %arg7[%c0_6, %c0_7] : memref<256x128xbf16, #tpu.memory_space<vmem>>, vector<256x128xbf16>
    %cst_8 = arith.constant dense<0.000000e+00> : vector<128x256xf32>
    %15 = tpu.matmul %13, %14, %cst_8 {dimension_numbers = #tpu.dot_dimension_numbers<[1], [1], [0], [0], [0, 0, 1, 0], [], []>} : vector<128x128xbf16>, vector<256x128xbf16>, vector<128x256xf32> -> vector<128x256xf32>
    %cst_9 = arith.constant dense<0xFF800000> : vector<128xf32>
    %16 = vector.multi_reduction <maximumf>, %15, %cst_9 [1] : vector<128x256xf32> to vector<128xf32>
    %17 = vector.shape_cast %16 : vector<128xf32> to vector<128x1xf32>
    %18 = vector.broadcast %17 : vector<128x1xf32> to vector<128x256xf32>
    %19 = arith.subf %15, %18 : vector<128x256xf32>
    %20 = math.exp %19 : vector<128x256xf32>
    %cst_10 = arith.constant dense<0.000000e+00> : vector<128xf32>
    %21 = vector.multi_reduction <add>, %20, %cst_10 [1] : vector<128x256xf32> to vector<128xf32>
    %22 = vector.shape_cast %21 : vector<128xf32> to vector<128x1xf32>
    %23 = tpu.reciprocal %22 {approx = true} : vector<128x1xf32> -> vector<128x1xf32>
    %24 = arith.mulf %22, %23 : vector<128x1xf32>
    %cst_11 = arith.constant 2.000000e+00 : f32
    %25 = vector.broadcast %cst_11 : f32 to vector<128x1xf32>
    %26 = arith.subf %25, %24 : vector<128x1xf32>
    %27 = arith.mulf %23, %26 : vector<128x1xf32>
    %28 = vector.broadcast %27 : vector<128x1xf32> to vector<128x256xf32>
    %29 = arith.mulf %20, %28 : vector<128x256xf32>
    %c0_12 = arith.constant 0 : index
    %c0_13 = arith.constant 0 : index
    %c0_14 = arith.constant 0 : index
    %c0_15 = arith.constant 0 : index
    %30 = vector.load %arg6[%c0_12, %c0_13, %c0_14, %c0_15] : memref<1x1x128x256xf32, #tpu.memory_space<vmem>>, vector<1x1x128x256xf32>
    %31 = vector.shape_cast %30 : vector<1x1x128x256xf32> to vector<128x256xf32>
    %32 = vector.shape_cast %29 : vector<128x256xf32> to vector<1x1x128x256xf32>
    tpu.vector_store %arg6[%c0_12, %c0_13, %c0_14, %c0_15], %32 {strides = array<i32>} : memref<1x1x128x256xf32, #tpu.memory_space<vmem>>, vector<1x1x128x256xf32>,
    return
  }
  func.func @transform_0(%arg0: i32, %arg1: i32, %arg2: i32) -> (i32, i32, i32) {
    %c0_i32 = arith.constant 0 : i32
    %c0_i32_0 = arith.constant 0 : i32
    %c0_i32_1 = arith.constant 0 : i32
    return %arg0, %c0_i32, %c0_i32_0 : i32, i32, i32
  }
  func.func @transform_1(%arg0: i32, %arg1: i32, %arg2: i32) -> (i32, i32, i32) {
    %c0_i32 = arith.constant 0 : i32
    %c0_i32_0 = arith.constant 0 : i32
    %c0_i32_1 = arith.constant 0 : i32
    return %arg1, %c0_i32, %c0_i32_0 : i32, i32, i32
  }
  func.func @transform_2(%arg0: i32, %arg1: i32, %arg2: i32) -> (i32, i32, i32) {
    %c0_i32 = arith.constant 0 : i32
    %c0_i32_0 = arith.constant 0 : i32
    %c0_i32_1 = arith.constant 0 : i32
    return %arg1, %c0_i32, %c0_i32_0 : i32, i32, i32
  }
  func.func @transform_3(%arg0: i32, %arg1: i32, %arg2: i32) -> (i32, i32, i32, i32) {
    %c0_i32 = arith.constant 0 : i32
    %c0_i32_0 = arith.constant 0 : i32
    return %arg0, %arg1, %arg2, %c0_i32 : i32, i32, i32, i32
  }
}

module attributes {stable_mosaic.version = 11 : i64} {
  func.func @_fused_attention_kernel(%arg0: i32, %arg1: i32, %arg2: i32, %arg3: memref<1x256x32xbf16, #tpu.memory_space<vmem>>, %arg4: memref<1x32x128xbf16, #tpu.memory_space<vmem>>, %arg5: memref<1x32x128xbf16, #tpu.memory_space<vmem>>, %arg6: memref<1x1x128x256xf32, #tpu.memory_space<vmem>>, %arg7: memref<256x128xbf16, #tpu.memory_space<vmem>>) attributes {dimension_semantics = [#tpu.dimension_semantics<parallel>, #tpu.dimension_semantics<parallel>, #tpu.dimension_semantics<arbitrary>], iteration_bounds = array<i64: 2, 2, 2>, scalar_prefetch = 0 : i64, scratch_operands = 1 : i64, tpu.core_type = #tpu.core_type<tc>, window_params = [{transform_indices = @transform_0, window_bounds = array<i64: 1, 256, 32>}, {transform_indices = @transform_1, window_bounds = array<i64: 1, 32, 128>}, {transform_indices = @transform_2, window_bounds = array<i64: 1, 32, 128>}, {transform_indices = @transform_3, window_bounds = array<i64: 1, 1, 128, 256>}]} {
    %c0_i32 = arith.constant 0 : i32
    %0 = arith.cmpi eq, %arg2, %c0_i32 : i32
    %1 = arith.extui %0 : i1 to i32
    %c0_i32_0 = arith.constant 0 : i32
    %2 = arith.cmpi ne, %1, %c0_i32_0 : i32
    scf.if %2 {
      %c0_16 = arith.constant 0 : index
      %c0_17 = arith.constant 0 : index
      %c0_18 = arith.constant 0 : index
      %33 = vector.load %arg3[%c0_16, %c0_17, %c0_18] : memref<1x256x32xbf16, #tpu.memory_space<vmem>>, vector<1x256x32xbf16>
      %34 = vector.shape_cast %33 : vector<1x256x32xbf16> to vector<256x32xbf16>
      %c0_19 = arith.constant 0 : index
      %c0_20 = arith.constant 0 : index
      %c0_21 = arith.constant 0 : index
      %35 = vector.load %arg5[%c0_19, %c0_20, %c0_21] : memref<1x32x128xbf16, #tpu.memory_space<vmem>>, vector<1x32x128xbf16>
      %36 = vector.shape_cast %35 : vector<1x32x128xbf16> to vector<32x128xbf16>
      %cst_22 = arith.constant dense<0.000000e+00> : vector<256x128xf32>
      %37 = tpu.matmul %34, %36, %cst_22 {dimension_numbers = #tpu.dot_dimension_numbers<[1], [0], [0], [1], [0, 0, 1, 1], [], []>} : vector<256x32xbf16>, vector<32x128xbf16>, vector<256x128xf32> -> vector<256x128xf32>
      %cst_23 = arith.constant 0.000000e+00 : f32
      %38 = vector.broadcast %cst_23 : f32 to vector<256x128xf32>
      %39 = arith.maximumf %37, %38 : vector<256x128xf32>
      %40 = arith.truncf %39 : vector<256x128xf32> to vector<256x128xbf16>
      %c0_24 = arith.constant 0 : index
      %c0_25 = arith.constant 0 : index
      %41 = vector.load %arg7[%c0_24, %c0_25] : memref<256x128xbf16, #tpu.memory_space<vmem>>, vector<256x128xbf16>
      tpu.vector_store %arg7[%c0_24, %c0_25], %40 {strides = array<i32>} : memref<256x128xbf16, #tpu.memory_space<vmem>>, vector<256x128xbf16>,
    } else {
    }
    %c128_i32 = arith.constant 128 : i32
    %3 = arith.muli %arg2, %c128_i32 : i32
    %4 = tpu.assume_multiple %3, 128 : i32
    %c0 = arith.constant 0 : index
    %5 = arith.index_cast %4 : i32 to index
    %c0_1 = arith.constant 0 : index
    %6 = vector.load %arg3[%c0, %5, %c0_1] : memref<1x256x32xbf16, #tpu.memory_space<vmem>>, vector<1x128x32xbf16>
    %7 = vector.shape_cast %6 : vector<1x128x32xbf16> to vector<128x32xbf16>
    %c0_2 = arith.constant 0 : index
    %c0_3 = arith.constant 0 : index
    %c0_4 = arith.constant 0 : index
    %8 = vector.load %arg4[%c0_2, %c0_3, %c0_4] : memref<1x32x128xbf16, #tpu.memory_space<vmem>>, vector<1x32x128xbf16>
    %9 = vector.shape_cast %8 : vector<1x32x128xbf16> to vector<32x128xbf16>
    %cst = arith.constant dense<0.000000e+00> : vector<128x128xf32>
    %10 = tpu.matmul %7, %9, %cst {dimension_numbers = #tpu.dot_dimension_numbers<[1], [0], [0], [1], [0, 0, 1, 1], [], []>} : vector<128x32xbf16>, vector<32x128xbf16>, vector<128x128xf32> -> vector<128x128xf32>
    %cst_5 = arith.constant 0.000000e+00 : f32
    %11 = vector.broadcast %cst_5 : f32 to vector<128x128xf32>
    %12 = arith.maximumf %10, %11 : vector<128x128xf32>
    %13 = arith.truncf %12 : vector<128x128xf32> to vector<128x128xbf16>
    %c0_6 = arith.constant 0 : index
    %c0_7 = arith.constant 0 : index
    %14 = vector.load %arg7[%c0_6, %c0_7] : memref<256x128xbf16, #tpu.memory_space<vmem>>, vector<256x128xbf16>
    %cst_8 = arith.constant dense<0.000000e+00> : vector<128x256xf32>
    %15 = tpu.matmul %13, %14, %cst_8 {dimension_numbers = #tpu.dot_dimension_numbers<[1], [1], [0], [0], [0, 0, 1, 0], [], []>} : vector<128x128xbf16>, vector<256x128xbf16>, vector<128x256xf32> -> vector<128x256xf32>
    %cst_9 = arith.constant dense<0xFF800000> : vector<128xf32>
    %16 = vector.multi_reduction <maximumf>, %15, %cst_9 [1] : vector<128x256xf32> to vector<128xf32>
    %17 = vector.shape_cast %16 : vector<128xf32> to vector<128x1xf32>
    %18 = vector.broadcast %17 : vector<128x1xf32> to vector<128x256xf32>
    %19 = arith.subf %15, %18 : vector<128x256xf32>
    %20 = math.exp %19 : vector<128x256xf32>
    %cst_10 = arith.constant dense<0.000000e+00> : vector<128xf32>
    %21 = vector.multi_reduction <add>, %20, %cst_10 [1] : vector<128x256xf32> to vector<128xf32>
    %22 = vector.shape_cast %21 : vector<128xf32> to vector<128x1xf32>
    %23 = tpu.reciprocal %22 {approx = true} : vector<128x1xf32> -> vector<128x1xf32>
    %24 = arith.mulf %22, %23 : vector<128x1xf32>
    %cst_11 = arith.constant 2.000000e+00 : f32
    %25 = vector.broadcast %cst_11 : f32 to vector<128x1xf32>
    %26 = arith.subf %25, %24 : vector<128x1xf32>
    %27 = arith.mulf %23, %26 : vector<128x1xf32>
    %28 = vector.broadcast %27 : vector<128x1xf32> to vector<128x256xf32>
    %29 = arith.mulf %20, %28 : vector<128x256xf32>
    %c0_12 = arith.constant 0 : index
    %c0_13 = arith.constant 0 : index
    %c0_14 = arith.constant 0 : index
    %c0_15 = arith.constant 0 : index
    %30 = vector.load %arg6[%c0_12, %c0_13, %c0_14, %c0_15] : memref<1x1x128x256xf32, #tpu.memory_space<vmem>>, vector<1x1x128x256xf32>
    %31 = vector.shape_cast %30 : vector<1x1x128x256xf32> to vector<128x256xf32>
    %32 = vector.shape_cast %29 : vector<128x256xf32> to vector<1x1x128x256xf32>
    tpu.vector_store %arg6[%c0_12, %c0_13, %c0_14, %c0_15], %32 {strides = array<i32>} : memref<1x1x128x256xf32, #tpu.memory_space<vmem>>, vector<1x1x128x256xf32>,
    return
  }
  func.func @transform_0(%arg0: i32, %arg1: i32, %arg2: i32) -> (i32, i32, i32) {
    %c0_i32 = arith.constant 0 : i32
    %c0_i32_0 = arith.constant 0 : i32
    %c0_i32_1 = arith.constant 0 : i32
    return %arg0, %c0_i32, %c0_i32_0 : i32, i32, i32
  }
  func.func @transform_1(%arg0: i32, %arg1: i32, %arg2: i32) -> (i32, i32, i32) {
    %c0_i32 = arith.constant 0 : i32
    %c0_i32_0 = arith.constant 0 : i32
    %c0_i32_1 = arith.constant 0 : i32
    return %arg1, %c0_i32, %c0_i32_0 : i32, i32, i32
  }
  func.func @transform_2(%arg0: i32, %arg1: i32, %arg2: i32) -> (i32, i32, i32) {
    %c0_i32 = arith.constant 0 : i32
    %c0_i32_0 = arith.constant 0 : i32
    %c0_i32_1 = arith.constant 0 : i32
    return %arg1, %c0_i32, %c0_i32_0 : i32, i32, i32
  }
  func.func @transform_3(%arg0: i32, %arg1: i32, %arg2: i32) -> (i32, i32, i32, i32) {
    %c0_i32 = arith.constant 0 : i32
    %c0_i32_0 = arith.constant 0 : i32
    return %arg0, %arg1, %arg2, %c0_i32 : i32, i32, i32, i32
  }
}

</mosaic_0001>

<llo_original>
// kernel: tpu_custom_call.1
$region0: #{tpu_custom_call.1}
  #allocation0 [shape = 'u32[]', space=smem, size = 0x4, offset = 0x4, fixed_abs, tag = 'smem constant byte address 0x4 - core index']
  #allocation1 [shape = 'u32[144,128]{1,0:T(1,128)}', space=vmem, size = 0x12000, scoped, tag = 'internal scratch']
  #allocation2 [shape = 'bf16[256,128]{1,0:T(8,128)(2,1)}', space=vmem, size = 0x10000, scoped, tag = 'scratch operand']
  %s0 = inlined_call_operand.vmem [shape: bf16[2,256,32], index: 0, kind: input, shape index: {}]
  %s1 = inlined_call_operand.vmem [shape: bf16[2,32,128], index: 1, kind: input, shape index: {}]
  %s2 = inlined_call_operand.vmem [shape: bf16[2,32,128], index: 2, kind: input, shape index: {}]
  %s3 = inlined_call_operand.hbm [shape: f32[2,2,256,256], index: 3, kind: output, shape index: {}]
  %s4 = sld [smem:[#allocation0]]
  $region49: #{tpu_custom_call.1} parent=0
    _
  %s6 = ssub.s32 1, %s4
  %s7 = scalar_select 0, %s6, %s4
  $region1: #{tpu_custom_call.1} parent=0
    #allocation3 [shape = 'u8[262144]{0}', space=vmem, size = 0x40000, scoped, tag = 'output window, operand 0']
    #allocation4 [shape = 's32[2]{0}', space=sflag, size = 0x8, scoped, tag = 'scoped memory for tpu_custom_call.1']
    %8 = vsyncpa [#allocation4], 0
    %s9 = scalar_lea.sflag [#allocation4], 1
    %10 = vsyncpa %s9, 0
    loop: start=0, step=1, limit=10
    $region2: #{tpu_custom_call.1} parent=1 // loop_pre_header
      _
    $region3: #{tpu_custom_call.1} parent=1 // loop_header
      %s12 = sphi 0, %s16
      %p13 = scmp.ge.s32.totalorder %s12, 10
      %s19 = sphi 0, %s38
      %s20 = sphi 0, %s34
      %s21 = sphi 0, %s30
      %s22 = sphi 0, %s19
      %s23 = sphi 0, %s20
      %s24 = sphi 0, %s21
      %s25 = sphi 0, %s22
      %s26 = sphi 0, %s23
      %s27 = sphi 0, %s24
      %s41 = sphi 0, %s43
      %s44 = sphi 0, %s41
      %s45 = sphi 0, %s44
      %s61 = sphi 0, %s45
      %s67 = sphi 0, %s69
      %s70 = sphi 0, %s67
      %s71 = sphi 0, %s70
      %s87 = sphi 0, %s71
      %s93 = sphi 0, %s95
      %s96 = sphi 0, %s93
      %s97 = sphi 0, %s96
      %s113 = sphi 0, %s97
      %s123 = sphi 0, %s125
      %s126 = sphi 0, %s123
      %s127 = sphi 0, %s126
      %s143 = sphi 0, %s127
    $region4: #{tpu_custom_call.1} parent=1 // loop_header_branch
      %15 = sbr.rel (%p13) target = $region8
    $region5: #{tpu_custom_call.1} parent=1 // loop_body
      %s17 = ssub.s32 %s12, 1
      %s18 = ssub.s32 %s12, 2
      %s28 = sadd.s32 1, %s21
      %p29 = scmp.ge.s32.totalorder %s28, 2
      %s30 = scalar_select %p29, 0, %s28
      %s31 = sadd.s32 1, %s20
      %s32 = scalar_select %p29, %s31, %s20
      %p33 = scmp.ge.s32.totalorder %s32, 2
      %s34 = scalar_select %p33, 0, %s32
      %s35 = sadd.s32 1, %s19
      %s36 = scalar_select %p33, %s35, %s19
      %p37 = scmp.ge.s32.totalorder %s36, 2
      %s38 = scalar_select %p37, 0, %s36
      %s39 = ssub.s32 %s19, %s38
      %p40 = scmp.eq.s32.totalorder %s39, 0
      %s42 = sadd.s32 %s41, 1
      %s43 = scalar_select %p40, %s41, %s42
      %p46 = pneg %p40
      %p47 = scmp.eq.s32.totalorder %s12, 7
      %p48 = por %p46, %p47
      %p49 = scmp.ne.s32.totalorder %s41, %s44
      %p50 = scmp.eq.s32.totalorder %s12, 0
      %p51 = por %p49, %p50
      %p52 = scmp.ne.s32.totalorder %s41, %s44
      %p53 = scmp.eq.s32.totalorder %s17, 7
      %p54 = por %p52, %p53
      %p55 = scmp.ne.s32.totalorder %s44, %s45
      %p56 = scmp.eq.s32.totalorder %s17, 0
      %p57 = por %p55, %p56
      %p58 = scmp.ne.s32.totalorder %s44, %s45
      %p59 = scmp.eq.s32.totalorder %s18, 7
      %p60 = por %p58, %p59
      %p62 = scmp.ne.s32.totalorder %s45, %s61
      %p63 = scmp.eq.s32.totalorder %s18, 0
      %p64 = por %p62, %p63
      %s65 = ssub.s32 %s20, %s34
      %p66 = scmp.eq.s32.totalorder %s65, 0
      %s68 = sadd.s32 %s67, 1
      %s69 = scalar_select %p66, %s67, %s68
      %p72 = pneg %p66
      %p73 = scmp.eq.s32.totalorder %s12, 7
      %p74 = por %p72, %p73
      %p75 = scmp.ne.s32.totalorder %s67, %s70
      %p76 = scmp.eq.s32.totalorder %s12, 0
      %p77 = por %p75, %p76
      %p78 = scmp.ne.s32.totalorder %s67, %s70
      %p79 = scmp.eq.s32.totalorder %s17, 7
      %p80 = por %p78, %p79
      %p81 = scmp.ne.s32.totalorder %s70, %s71
      %p82 = scmp.eq.s32.totalorder %s17, 0
      %p83 = por %p81, %p82
      %p84 = scmp.ne.s32.totalorder %s70, %s71
      %p85 = scmp.eq.s32.totalorder %s18, 7
      %p86 = por %p84, %p85
      %p88 = scmp.ne.s32.totalorder %s71, %s87
      %p89 = scmp.eq.s32.totalorder %s18, 0
      %p90 = por %p88, %p89
      %s91 = ssub.s32 %s20, %s34
      %p92 = scmp.eq.s32.totalorder %s91, 0
      %s94 = sadd.s32 %s93, 1
      %s95 = scalar_select %p92, %s93, %s94
      %p98 = pneg %p92
      %p99 = scmp.eq.s32.totalorder %s12, 7
      %p100 = por %p98, %p99
      %p101 = scmp.ne.s32.totalorder %s93, %s96
      %p102 = scmp.eq.s32.totalorder %s12, 0
      %p103 = por %p101, %p102
      %p104 = scmp.ne.s32.totalorder %s93, %s96
      %p105 = scmp.eq.s32.totalorder %s17, 7
      %p106 = por %p104, %p105
      %p107 = scmp.ne.s32.totalorder %s96, %s97
      %p108 = scmp.eq.s32.totalorder %s17, 0
      %p109 = por %p107, %p108
      %p110 = scmp.ne.s32.totalorder %s96, %s97
      %p111 = scmp.eq.s32.totalorder %s18, 7
      %p112 = por %p110, %p111
      %p114 = scmp.ne.s32.totalorder %s97, %s113
      %p115 = scmp.eq.s32.totalorder %s18, 0
      %p116 = por %p114, %p115
      %s117 = ssub.s32 %s19, %s38
      %s118 = ssub.s32 %s20, %s34
      %s119 = sor.u32 %s117, %s118
      %s120 = ssub.s32 %s21, %s30
      %s121 = sor.u32 %s119, %s120
      %p122 = scmp.eq.s32.totalorder %s121, 0
      %s124 = sadd.s32 %s123, 1
      %s125 = scalar_select %p122, %s123, %s124
      %p128 = pneg %p122
      %p129 = scmp.eq.s32.totalorder %s12, 7
      %p130 = por %p128, %p129
      %p131 = scmp.ne.s32.totalorder %s123, %s126
      %p132 = scmp.eq.s32.totalorder %s12, 0
      %p133 = por %p131, %p132
      %p134 = scmp.ne.s32.totalorder %s123, %s126
      %p135 = scmp.eq.s32.totalorder %s17, 7
      %p136 = por %p134, %p135
      %p137 = scmp.ne.s32.totalorder %s126, %s127
      %p138 = scmp.eq.s32.totalorder %s17, 0
      %p139 = por %p137, %p138
      %p140 = scmp.ne.s32.totalorder %s126, %s127
      %p141 = scmp.eq.s32.totalorder %s18, 7
      %p142 = por %p140, %p141
      %p144 = scmp.ne.s32.totalorder %s127, %s143
      %p145 = scmp.eq.s32.totalorder %s18, 0
      %p146 = por %p144, %p145
      %p147 = scmp.le.s32.totalorder 1, %s12
      %p148 = scmp.lt.s32.totalorder %s12, 9
      %p149 = pnand %p147, %p148
      %p150 = pneg %p149
      // Predicated region
      $region9: #{tpu_custom_call.1} parent=5 // pred_check
        _
      $region10: #{tpu_custom_call.1} parent=5 // pred_check_branch
        %152 = sbr.rel (%p149) target = $region12
      $region11: #{tpu_custom_call.1} parent=5 // pred_region
        %s153 = ssub.s32 %s12, 1
        // Predicated region
        $region13: #{tpu_custom_call.1} parent=11 // pred_check
          %p154 = pneg %p57
        $region14: #{tpu_custom_call.1} parent=11 // pred_check_branch
          %156 = sbr.rel (%p154) target = $region16
        $region15: #{tpu_custom_call.1} parent=11 // pred_region
          %p157 = scmp.lt.s32.totalorder %s22, 1
          %s158 = scalar_select %p157, %s22, 1
          %s159 = smul.addr %s158, 32
          %s160 = smul.addr %s159, 4
          %s161 = scalar_lea.vmem %s0, %s160
        $region16: #{tpu_custom_call.1} parent=11 // pred_fallthru
          _
        // Predicated region
        $region17: #{tpu_custom_call.1} parent=11 // pred_check
          %p162 = pneg %p83
        $region18: #{tpu_custom_call.1} parent=11 // pred_check_branch
          %164 = sbr.rel (%p162) target = $region20
        $region19: #{tpu_custom_call.1} parent=11 // pred_region
          %p165 = scmp.lt.s32.totalorder %s23, 1
          %s166 = scalar_select %p165, %s23, 1
          %s167 = smul.addr %s166, 4
          %s168 = smul.addr %s167, 4
          %s169 = scalar_lea.vmem %s1, %s168
        $region20: #{tpu_custom_call.1} parent=11 // pred_fallthru
          _
        // Predicated region
        $region21: #{tpu_custom_call.1} parent=11 // pred_check
          %p170 = pneg %p109
        $region22: #{tpu_custom_call.1} parent=11 // pred_check_branch
          %172 = sbr.rel (%p170) target = $region24
        $region23: #{tpu_custom_call.1} parent=11 // pred_region
          %p173 = scmp.lt.s32.totalorder %s23, 1
          %s174 = scalar_select %p173, %s23, 1
          %s175 = smul.addr %s174, 4
          %s176 = smul.addr %s175, 4
          %s177 = scalar_lea.vmem %s2, %s176
        $region24: #{tpu_custom_call.1} parent=11 // pred_fallthru
          _
      $region12: #{tpu_custom_call.1} parent=5 // pred_fallthru
        _
      %p178 = scmp.lt.s32.totalorder %s12, 8
      // Predicated region
      $region25: #{tpu_custom_call.1} parent=5 // pred_check
        %p179 = pneg %p178
      $region26: #{tpu_custom_call.1} parent=5 // pred_check_branch
        %181 = sbr.rel (%p179) target = $region28
      $region27: #{tpu_custom_call.1} parent=5 // pred_region
        _
      $region28: #{tpu_custom_call.1} parent=5 // pred_fallthru
        _
      %p182 = scmp.le.s32.totalorder 1, %s12
      %p183 = scmp.lt.s32.totalorder %s12, 9
      %p184 = pnand %p182, %p183
      %p185 = pneg %p184
      // Predicated region
      $region29: #{tpu_custom_call.1} parent=5 // pred_check
        _
      $region30: #{tpu_custom_call.1} parent=5 // pred_check_branch
        %187 = sbr.rel (%p184) target = $region32
      $region31: #{tpu_custom_call.1} parent=5 // pred_region
        %s188 = ssub.s32 %s12, 1
        %p189 = scmp.lt.s32.totalorder %s22, 1
        %s190 = scalar_select %p189, %s22, 1
        %s191 = smul.addr %s190, 32
        %s192 = smul.addr %s191, 4
        %s193 = scalar_lea.vmem %s0, %s192
        %p194 = pneg %p57
        %p195 = pneg %p54
        %p196 = scmp.lt.s32.totalorder %s23, 1
        %s197 = scalar_select %p196, %s23, 1
        %s198 = smul.addr %s197, 4
        %s199 = smul.addr %s198, 4
        %s200 = scalar_lea.vmem %s1, %s199
        %p201 = pneg %p83
        %p202 = pneg %p80
        %p203 = scmp.lt.s32.totalorder %s23, 1
        %s204 = scalar_select %p203, %s23, 1
        %s205 = smul.addr %s204, 4
        %s206 = smul.addr %s205, 4
        %s207 = scalar_lea.vmem %s2, %s206
        %p208 = pneg %p109
        %p209 = pneg %p106
        %p210 = pneg %p139
        %p211 = pneg %p136
        %s212 = sand.u32 %s126, 1
        %s213 = scalar_lea.sflag [#allocation4], %s212
        %s214 = sand.u32 %s126, 1
        %s215 = smul.addr %s214, 256
        %s216 = scalar_lea.vmem [#allocation3], %s215
        %p217 = scmp.lt.s32.totalorder %s22, 1
        %s218 = scalar_select %p217, %s22, 1
        %s219 = smul.addr %s218, 32
        %s220 = smul.addr %s219, 4
        %s221 = scalar_lea.vmem %s0, %s220
        %p222 = scmp.lt.s32.totalorder %s23, 1
        %s223 = scalar_select %p222, %s23, 1
        %s224 = smul.addr %s223, 4
        %s225 = smul.addr %s224, 4
        %s226 = scalar_lea.vmem %s1, %s225
        %p227 = scmp.lt.s32.totalorder %s23, 1
        %s228 = scalar_select %p227, %s23, 1
        %s229 = smul.addr %s228, 4
        %s230 = smul.addr %s229, 4
        %s231 = scalar_lea.vmem %s2, %s230
        %s232 = smul.u32 16, %s24
        %p234 = scmp.eq.s32.totalorder %s24, 0
        // Predicated region
        $region33: #{tpu_custom_call.1} parent=31 // pred_check
          %p235 = pneg %p234
        $region34: #{tpu_custom_call.1} parent=31 // pred_check_branch
          %237 = sbr.rel (%p235) target = $region36
        $region35: #{tpu_custom_call.1} parent=31 // pred_region
          %v238 = vld [vmem:[%s221] sm:$0xf]
          %v239 = vld [vmem:[%s221 + $0x4] sm:$0xf]
          %v240 = vld [vmem:[%s221 + $0x8] sm:$0xf]
          %v241 = vld [vmem:[%s221 + $0xc] sm:$0xf]
          %v242 = vld [vmem:[%s221 + $0x10] sm:$0xf]
          %v243 = vld [vmem:[%s221 + $0x14] sm:$0xf]
          %v244 = vld [vmem:[%s221 + $0x18] sm:$0xf]
          %v245 = vld [vmem:[%s221 + $0x1c] sm:$0xf]
          %v246 = vld [vmem:[%s221 + $0x20] sm:$0xf]
          %v247 = vld [vmem:[%s221 + $0x24] sm:$0xf]
          %v248 = vld [vmem:[%s221 + $0x28] sm:$0xf]
          %v249 = vld [vmem:[%s221 + $0x2c] sm:$0xf]
          %v250 = vld [vmem:[%s221 + $0x30] sm:$0xf]
          %v251 = vld [vmem:[%s221 + $0x34] sm:$0xf]
          %v252 = vld [vmem:[%s221 + $0x38] sm:$0xf]
          %v253 = vld [vmem:[%s221 + $0x3c] sm:$0xf]
          %v254 = vld [vmem:[%s221 + $0x40] sm:$0xf]
          %v255 = vld [vmem:[%s221 + $0x44] sm:$0xf]
          %v256 = vld [vmem:[%s221 + $0x48] sm:$0xf]
          %v257 = vld [vmem:[%s221 + $0x4c] sm:$0xf]
          %v258 = vld [vmem:[%s221 + $0x50] sm:$0xf]
          %v259 = vld [vmem:[%s221 + $0x54] sm:$0xf]
          %v260 = vld [vmem:[%s221 + $0x58] sm:$0xf]
          %v261 = vld [vmem:[%s221 + $0x5c] sm:$0xf]
          %v262 = vld [vmem:[%s221 + $0x60] sm:$0xf]
          %v263 = vld [vmem:[%s221 + $0x64] sm:$0xf]
          %v264 = vld [vmem:[%s221 + $0x68] sm:$0xf]
          %v265 = vld [vmem:[%s221 + $0x6c] sm:$0xf]
          %v266 = vld [vmem:[%s221 + $0x70] sm:$0xf]
          %v267 = vld [vmem:[%s221 + $0x74] sm:$0xf]
          %v268 = vld [vmem:[%s221 + $0x78] sm:$0xf]
          %v269 = vld [vmem:[%s221 + $0x7c] sm:$0xf]
          %v270 = vld [vmem:[%s231] sm:$0xf]
          %v271 = vld [vmem:[%s231 + $0x4] sm:$0xf]
          %v272 = vld [vmem:[%s231 + $0x8] sm:$0xf]
          %v273 = vld [vmem:[%s231 + $0xc] sm:$0xf]
          %v306 = vunpack.c.l.b16 %v238
          %v307 = vunpack.c.l.b16 %v239
          %v308 = vunpack.c.l.b16 %v240
          %v309 = vunpack.c.l.b16 %v241
          %v310 = vunpack.c.l.b16 %v242
          %v311 = vunpack.c.l.b16 %v243
          %v312 = vunpack.c.l.b16 %v244
          %v313 = vunpack.c.l.b16 %v245
          %v314 = vunpack.c.l.b16 %v246
          %v315 = vunpack.c.l.b16 %v247
          %v316 = vunpack.c.l.b16 %v248
          %v317 = vunpack.c.l.b16 %v249
          %v318 = vunpack.c.l.b16 %v250
          %v319 = vunpack.c.l.b16 %v251
          %v320 = vunpack.c.l.b16 %v252
          %v321 = vunpack.c.l.b16 %v253
          %v322 = vunpack.c.l.b16 %v254
          %v323 = vunpack.c.l.b16 %v255
          %v324 = vunpack.c.l.b16 %v256
          %v325 = vunpack.c.l.b16 %v257
          %v326 = vunpack.c.l.b16 %v258
          %v327 = vunpack.c.l.b16 %v259
          %v328 = vunpack.c.l.b16 %v260
          %v329 = vunpack.c.l.b16 %v261
          %v330 = vunpack.c.l.b16 %v262
          %v331 = vunpack.c.l.b16 %v263
          %v332 = vunpack.c.l.b16 %v264
          %v333 = vunpack.c.l.b16 %v265
          %v334 = vunpack.c.l.b16 %v266
          %v335 = vunpack.c.l.b16 %v267
          %v336 = vunpack.c.l.b16 %v268
          %v337 = vunpack.c.l.b16 %v269
          %v338 = vpack.c.b16 %v307, %v306
          %v339 = vpack.c.b16 %v309, %v308
          %v340 = vpack.c.b16 %v311, %v310
          %v341 = vpack.c.b16 %v313, %v312
          %v342 = vpack.c.b16 %v315, %v314
          %v343 = vpack.c.b16 %v317, %v316
          %v344 = vpack.c.b16 %v319, %v318
          %v345 = vpack.c.b16 %v321, %v320
          %v346 = vpack.c.b16 %v323, %v322
          %v347 = vpack.c.b16 %v325, %v324
          %v348 = vpack.c.b16 %v327, %v326
          %v349 = vpack.c.b16 %v329, %v328
          %v350 = vpack.c.b16 %v331, %v330
          %v351 = vpack.c.b16 %v333, %v332
          %v352 = vpack.c.b16 %v335, %v334
          %v353 = vpack.c.b16 %v337, %v336
          %v358 = vunpack.c.l.b16 %v270
          %v359 = vunpack.c.l.b16 %v271
          %v360 = vunpack.c.l.b16 %v272
          %v361 = vunpack.c.l.b16 %v273
          %v362 = vpack.c.b16 %v359, %v358
          %v363 = vpack.c.b16 %v361, %v360
          %vm366 = vcmask 261120
          %v368 = vsel %vm366, %v338, 0
          %v371 = vsel %vm366, %v339, 0
          %v374 = vsel %vm366, %v340, 0
          %v377 = vsel %vm366, %v341, 0
          %v380 = vsel %vm366, %v342, 0
          %v383 = vsel %vm366, %v343, 0
          %v386 = vsel %vm366, %v344, 0
          %v389 = vsel %vm366, %v345, 0
          %v392 = vsel %vm366, %v346, 0
          %v395 = vsel %vm366, %v347, 0
          %v398 = vsel %vm366, %v348, 0
          %v401 = vsel %vm366, %v349, 0
          %v404 = vsel %vm366, %v350, 0
          %v407 = vsel %vm366, %v351, 0
          %v410 = vsel %vm366, %v352, 0
          %v413 = vsel %vm366, %v353, 0
          %415 = vmatprep.subr.bf16.mxu0 0
          %416 = vmatpush1.bf16.msra.mxu0 0
          %417 = vmatprep.subr.bf16.mxu0 0
          %418 = vmatpush1.bf16.msra.mxu0 0
          %419 = vmatprep.subr.bf16.mxu0 0
          %420 = vmatpush1.bf16.msra.mxu0 0
          %421 = vmatprep.subr.bf16.mxu0 0
          %422 = vmatpush1.bf16.msra.mxu0 0
          %423 = vmatprep.subr.bf16.mxu0 0
          %424 = vmatpush1.bf16.msra.mxu0 0
          %425 = vmatprep.subr.bf16.mxu0 0
          %426 = vmatpush1.bf16.msra.mxu0 0
          %427 = vmatprep.subr.bf16.mxu0 0
          %428 = vmatpush1.bf16.msra.mxu0 %v363
          %429 = vmatprep.subr.bf16.mxu0 0
          %430 = vmatpush1.bf16.msra.mxu0 %v362
          %431 = vmatprep.subr.bf16.mxu0 0
          %432 = vmatpush2.bf16.msra.mxu0 0
          %433 = vmatprep.subr.bf16.mxu0 0
          %434 = vmatpush2.bf16.msra.mxu0 0
          %435 = vmatprep.subr.bf16.mxu0 0
          %436 = vmatpush2.bf16.msra.mxu0 0
          %437 = vmatprep.subr.bf16.mxu0 0
          %438 = vmatpush2.bf16.msra.mxu0 0
          %439 = vmatprep.subr.bf16.mxu0 0
          %440 = vmatpush2.bf16.msra.mxu0 0
          %441 = vmatprep.subr.bf16.mxu0 0
          %442 = vmatpush2.bf16.msra.mxu0 0
          %443 = vmatprep.subr.bf16.mxu0 0
          %444 = vmatpush2.bf16.msra.mxu0 0
          %445 = vmatprep.subr.bf16.mxu0 0
          %446 = vmatpush2.bf16.msra.mxu0 0
          %447 = vmatprep.mubr.bf16.mxu0 0
          %448 = vmatmul.mubr.bf16.gmra.mxu0 %v368
          %v449 = vpop.f32.mrf.mxu0
          %v450 = vadd.f32 0.0, %v449
          %v451 = vpop.f32.mrf.mxu0
          %v452 = vpop.f32.mrf.mxu0
          %v453 = vadd.f32 0.0, %v452
          %v454 = vpop.f32.mrf.mxu0
          %455 = vmatprep.mubr.bf16.mxu0 0
          %456 = vmatmul.mubr.bf16.gmra.mxu0 %v371
          %v457 = vpop.f32.mrf.mxu0
          %v458 = vadd.f32 0.0, %v457
          %v459 = vpop.f32.mrf.mxu0
          %v460 = vpop.f32.mrf.mxu0
          %v461 = vadd.f32 0.0, %v460
          %v462 = vpop.f32.mrf.mxu0
          %463 = vmatprep.mubr.bf16.mxu0 0
          %464 = vmatmul.mubr.bf16.gmra.mxu0 %v374
          %v465 = vpop.f32.mrf.mxu0
          %v466 = vadd.f32 0.0, %v465
          %v467 = vpop.f32.mrf.mxu0
          %v468 = vpop.f32.mrf.mxu0
          %v469 = vadd.f32 0.0, %v468
          %v470 = vpop.f32.mrf.mxu0
          %471 = vmatprep.mubr.bf16.mxu0 0
          %472 = vmatmul.mubr.bf16.gmra.mxu0 %v377
          %v473 = vpop.f32.mrf.mxu0
          %v474 = vadd.f32 0.0, %v473
          %v475 = vpop.f32.mrf.mxu0
          %v476 = vpop.f32.mrf.mxu0
          %v477 = vadd.f32 0.0, %v476
          %v478 = vpop.f32.mrf.mxu0
          %479 = vmatprep.mubr.bf16.mxu0 0
          %480 = vmatmul.mubr.bf16.gmra.mxu0 %v380
          %v481 = vpop.f32.mrf.mxu0
          %v482 = vadd.f32 0.0, %v481
          %v483 = vpop.f32.mrf.mxu0
          %v484 = vpop.f32.mrf.mxu0
          %v485 = vadd.f32 0.0, %v484
          %v486 = vpop.f32.mrf.mxu0
          %487 = vmatprep.mubr.bf16.mxu0 0
          %488 = vmatmul.mubr.bf16.gmra.mxu0 %v383
          %v489 = vpop.f32.mrf.mxu0
          %v490 = vadd.f32 0.0, %v489
          %v491 = vpop.f32.mrf.mxu0
          %v492 = vpop.f32.mrf.mxu0
          %v493 = vadd.f32 0.0, %v492
          %v494 = vpop.f32.mrf.mxu0
          %495 = vmatprep.mubr.bf16.mxu0 0
          %496 = vmatmul.mubr.bf16.gmra.mxu0 %v386
          %v497 = vpop.f32.mrf.mxu0
          %v498 = vadd.f32 0.0, %v497
          %v499 = vpop.f32.mrf.mxu0
          %v500 = vpop.f32.mrf.mxu0
          %v501 = vadd.f32 0.0, %v500
          %v502 = vpop.f32.mrf.mxu0
          %503 = vmatprep.mubr.bf16.mxu0 0
          %504 = vmatmul.mubr.bf16.gmra.mxu0 %v389
          %v505 = vpop.f32.mrf.mxu0
          %v506 = vadd.f32 0.0, %v505
          %v507 = vpop.f32.mrf.mxu0
          %v508 = vpop.f32.mrf.mxu0
          %v509 = vadd.f32 0.0, %v508
          %v510 = vpop.f32.mrf.mxu0
          %511 = vmatprep.mubr.bf16.mxu0 0
          %512 = vmatmul.mubr.bf16.gmra.mxu0 %v392
          %v513 = vpop.f32.mrf.mxu0
          %v514 = vadd.f32 0.0, %v513
          %v515 = vpop.f32.mrf.mxu0
          %v516 = vpop.f32.mrf.mxu0
          %v517 = vadd.f32 0.0, %v516
          %v518 = vpop.f32.mrf.mxu0
          %519 = vmatprep.mubr.bf16.mxu0 0
          %520 = vmatmul.mubr.bf16.gmra.mxu0 %v395
          %v521 = vpop.f32.mrf.mxu0
          %v522 = vadd.f32 0.0, %v521
          %v523 = vpop.f32.mrf.mxu0
          %v524 = vpop.f32.mrf.mxu0
          %v525 = vadd.f32 0.0, %v524
          %v526 = vpop.f32.mrf.mxu0
          %527 = vmatprep.mubr.bf16.mxu0 0
          %528 = vmatmul.mubr.bf16.gmra.mxu0 %v398
          %v529 = vpop.f32.mrf.mxu0
          %v530 = vadd.f32 0.0, %v529
          %v531 = vpop.f32.mrf.mxu0
          %v532 = vpop.f32.mrf.mxu0
          %v533 = vadd.f32 0.0, %v532
          %v534 = vpop.f32.mrf.mxu0
          %535 = vmatprep.mubr.bf16.mxu0 0
          %536 = vmatmul.mubr.bf16.gmra.mxu0 %v401
          %v537 = vpop.f32.mrf.mxu0
          %v538 = vadd.f32 0.0, %v537
          %v539 = vpop.f32.mrf.mxu0
          %v540 = vpop.f32.mrf.mxu0
          %v541 = vadd.f32 0.0, %v540
          %v542 = vpop.f32.mrf.mxu0
          %543 = vmatprep.mubr.bf16.mxu0 0
          %544 = vmatmul.mubr.bf16.gmra.mxu0 %v404
          %v545 = vpop.f32.mrf.mxu0
          %v546 = vadd.f32 0.0, %v545
          %v547 = vpop.f32.mrf.mxu0
          %v548 = vpop.f32.mrf.mxu0
          %v549 = vadd.f32 0.0, %v548
          %v550 = vpop.f32.mrf.mxu0
          %551 = vmatprep.mubr.bf16.mxu0 0
          %552 = vmatmul.mubr.bf16.gmra.mxu0 %v407
          %v553 = vpop.f32.mrf.mxu0
          %v554 = vadd.f32 0.0, %v553
          %v555 = vpop.f32.mrf.mxu0
          %v556 = vpop.f32.mrf.mxu0
          %v557 = vadd.f32 0.0, %v556
          %v558 = vpop.f32.mrf.mxu0
          %559 = vmatprep.mubr.bf16.mxu0 0
          %560 = vmatmul.mubr.bf16.gmra.mxu0 %v410
          %v561 = vpop.f32.mrf.mxu0
          %v562 = vadd.f32 0.0, %v561
          %v563 = vpop.f32.mrf.mxu0
          %v564 = vpop.f32.mrf.mxu0
          %v565 = vadd.f32 0.0, %v564
          %v566 = vpop.f32.mrf.mxu0
          %567 = vmatprep.mubr.bf16.mxu0 0
          %568 = vmatmul.mubr.bf16.gmra.mxu0 %v413
          %v569 = vpop.f32.mrf.mxu0
          %v570 = vadd.f32 0.0, %v569
          %v571 = vpop.f32.mrf.mxu0
          %v572 = vpop.f32.mrf.mxu0
          %v573 = vadd.f32 0.0, %v572
          %v574 = vpop.f32.mrf.mxu0
          %575 = vdwg.mxu0
          %v576 = vmax.f32 %v450, 0.0
          %v577 = vmax.f32 %v453, 0.0
          %v578 = vmax.f32 %v458, 0.0
          %v579 = vmax.f32 %v461, 0.0
          %v580 = vmax.f32 %v466, 0.0
          %v581 = vmax.f32 %v469, 0.0
          %v582 = vmax.f32 %v474, 0.0
          %v583 = vmax.f32 %v477, 0.0
          %v584 = vmax.f32 %v482, 0.0
          %v585 = vmax.f32 %v485, 0.0
          %v586 = vmax.f32 %v490, 0.0
          %v587 = vmax.f32 %v493, 0.0
          %v588 = vmax.f32 %v498, 0.0
          %v589 = vmax.f32 %v501, 0.0
          %v590 = vmax.f32 %v506, 0.0
          %v591 = vmax.f32 %v509, 0.0
          %v592 = vmax.f32 %v514, 0.0
          %v593 = vmax.f32 %v517, 0.0
          %v594 = vmax.f32 %v522, 0.0
          %v595 = vmax.f32 %v525, 0.0
          %v596 = vmax.f32 %v530, 0.0
          %v597 = vmax.f32 %v533, 0.0
          %v598 = vmax.f32 %v538, 0.0
          %v599 = vmax.f32 %v541, 0.0
          %v600 = vmax.f32 %v546, 0.0
          %v601 = vmax.f32 %v549, 0.0
          %v602 = vmax.f32 %v554, 0.0
          %v603 = vmax.f32 %v557, 0.0
          %v604 = vmax.f32 %v562, 0.0
          %v605 = vmax.f32 %v565, 0.0
          %v606 = vmax.f32 %v570, 0.0
          %v607 = vmax.f32 %v573, 0.0
          %v608 = vpack.c.bf16 %v577, %v576
          %v609 = vpack.c.bf16 %v579, %v578
          %v610 = vpack.c.bf16 %v581, %v580
          %v611 = vpack.c.bf16 %v583, %v582
          %v612 = vpack.c.bf16 %v585, %v584
          %v613 = vpack.c.bf16 %v587, %v586
          %v614 = vpack.c.bf16 %v589, %v588
          %v615 = vpack.c.bf16 %v591, %v590
          %v616 = vpack.c.bf16 %v593, %v592
          %v617 = vpack.c.bf16 %v595, %v594
          %v618 = vpack.c.bf16 %v597, %v596
          %v619 = vpack.c.bf16 %v599, %v598
          %v620 = vpack.c.bf16 %v601, %v600
          %v621 = vpack.c.bf16 %v603, %v602
          %v622 = vpack.c.bf16 %v605, %v604
          %v623 = vpack.c.bf16 %v607, %v606
          %v640 = vunpack.c.l.b16 %v608
          %v641 = vunpack.c.h.b16 %v608
          %v642 = vunpack.c.l.b16 %v609
          %v643 = vunpack.c.h.b16 %v609
          %v644 = vunpack.c.l.b16 %v610
          %v645 = vunpack.c.h.b16 %v610
          %v646 = vunpack.c.l.b16 %v611
          %v647 = vunpack.c.h.b16 %v611
          %v648 = vunpack.c.l.b16 %v612
          %v649 = vunpack.c.h.b16 %v612
          %v650 = vunpack.c.l.b16 %v613
          %v651 = vunpack.c.h.b16 %v613
          %v652 = vunpack.c.l.b16 %v614
          %v653 = vunpack.c.h.b16 %v614
          %v654 = vunpack.c.l.b16 %v615
          %v655 = vunpack.c.h.b16 %v615
          %v656 = vunpack.c.l.b16 %v616
          %v657 = vunpack.c.h.b16 %v616
          %v658 = vunpack.c.l.b16 %v617
          %v659 = vunpack.c.h.b16 %v617
          %v660 = vunpack.c.l.b16 %v618
          %v661 = vunpack.c.h.b16 %v618
          %v662 = vunpack.c.l.b16 %v619
          %v663 = vunpack.c.h.b16 %v619
          %v664 = vunpack.c.l.b16 %v620
          %v665 = vunpack.c.h.b16 %v620
          %v666 = vunpack.c.l.b16 %v621
          %v667 = vunpack.c.h.b16 %v621
          %v668 = vunpack.c.l.b16 %v622
          %v669 = vunpack.c.h.b16 %v622
          %v670 = vunpack.c.l.b16 %v623
          %v671 = vunpack.c.h.b16 %v623
          %v672 = vpack.c.b16 %v640, %v640
          %v673 = vpack.c.b16 %v641, %v641
          %v674 = vpack.c.b16 %v642, %v642
          %v675 = vpack.c.b16 %v643, %v643
          %v676 = vpack.c.b16 %v644, %v644
          %v677 = vpack.c.b16 %v645, %v645
          %v678 = vpack.c.b16 %v646, %v646
          %v679 = vpack.c.b16 %v647, %v647
          %v680 = vpack.c.b16 %v648, %v648
          %v681 = vpack.c.b16 %v649, %v649
          %v682 = vpack.c.b16 %v650, %v650
          %v683 = vpack.c.b16 %v651, %v651
          %v684 = vpack.c.b16 %v652, %v652
          %v685 = vpack.c.b16 %v653, %v653
          %v686 = vpack.c.b16 %v654, %v654
          %v687 = vpack.c.b16 %v655, %v655
          %v688 = vpack.c.b16 %v656, %v656
          %v689 = vpack.c.b16 %v657, %v657
          %v690 = vpack.c.b16 %v658, %v658
          %v691 = vpack.c.b16 %v659, %v659
          %v692 = vpack.c.b16 %v660, %v660
          %v693 = vpack.c.b16 %v661, %v661
          %v694 = vpack.c.b16 %v662, %v662
          %v695 = vpack.c.b16 %v663, %v663
          %v696 = vpack.c.b16 %v664, %v664
          %v697 = vpack.c.b16 %v665, %v665
          %v698 = vpack.c.b16 %v666, %v666
          %v699 = vpack.c.b16 %v667, %v667
          %v700 = vpack.c.b16 %v668, %v668
          %v701 = vpack.c.b16 %v669, %v669
          %v702 = vpack.c.b16 %v670, %v670
          %v703 = vpack.c.b16 %v671, %v671
          %736 = vst [vmem:[#allocation2] sm:$0xf] %v672
          %737 = vst [vmem:[#allocation2 + $0x4] sm:$0xf] %v673
          %738 = vst [vmem:[#allocation2 + $0x8] sm:$0xf] %v674
          %739 = vst [vmem:[#allocation2 + $0xc] sm:$0xf] %v675
          %740 = vst [vmem:[#allocation2 + $0x10] sm:$0xf] %v676
          %741 = vst [vmem:[#allocation2 + $0x14] sm:$0xf] %v677
          %742 = vst [vmem:[#allocation2 + $0x18] sm:$0xf] %v678
          %743 = vst [vmem:[#allocation2 + $0x1c] sm:$0xf] %v679
          %744 = vst [vmem:[#allocation2 + $0x20] sm:$0xf] %v680
          %745 = vst [vmem:[#allocation2 + $0x24] sm:$0xf] %v681
          %746 = vst [vmem:[#allocation2 + $0x28] sm:$0xf] %v682
          %747 = vst [vmem:[#allocation2 + $0x2c] sm:$0xf] %v683
          %748 = vst [vmem:[#allocation2 + $0x30] sm:$0xf] %v684
          %749 = vst [vmem:[#allocation2 + $0x34] sm:$0xf] %v685
          %750 = vst [vmem:[#allocation2 + $0x38] sm:$0xf] %v686
          %751 = vst [vmem:[#allocation2 + $0x3c] sm:$0xf] %v687
          %752 = vst [vmem:[#allocation2 + $0x40] sm:$0xf] %v688
          %753 = vst [vmem:[#allocation2 + $0x44] sm:$0xf] %v689
          %754 = vst [vmem:[#allocation2 + $0x48] sm:$0xf] %v690
          %755 = vst [vmem:[#allocation2 + $0x4c] sm:$0xf] %v691
          %756 = vst [vmem:[#allocation2 + $0x50] sm:$0xf] %v692
          %757 = vst [vmem:[#allocation2 + $0x54] sm:$0xf] %v693
          %758 = vst [vmem:[#allocation2 + $0x58] sm:$0xf] %v694
          %759 = vst [vmem:[#allocation2 + $0x5c] sm:$0xf] %v695
          %760 = vst [vmem:[#allocation2 + $0x60] sm:$0xf] %v696
          %761 = vst [vmem:[#allocation2 + $0x64] sm:$0xf] %v697
          %762 = vst [vmem:[#allocation2 + $0x68] sm:$0xf] %v698
          %763 = vst [vmem:[#allocation2 + $0x6c] sm:$0xf] %v699
          %764 = vst [vmem:[#allocation2 + $0x70] sm:$0xf] %v700
          %765 = vst [vmem:[#allocation2 + $0x74] sm:$0xf] %v701
          %766 = vst [vmem:[#allocation2 + $0x78] sm:$0xf] %v702
          %767 = vst [vmem:[#allocation2 + $0x7c] sm:$0xf] %v703
        $region36: #{tpu_custom_call.1} parent=31 // pred_fallthru
          _
        %s768 = smul.u32 %s24, 128
        %s769 = sshra.s32 %s768, 3
        %s770 = sand.u32 %s768, 7
        %s771 = smul.addr %s769, 4
        %s772 = scalar_lea.vmem %s221, %s771
        %v773 = vld [vmem:[%s772] sm:$0xf]
        %v774 = vld [vmem:[%s772 + $0x4] sm:$0xf]
        %v775 = vld [vmem:[%s772 + $0x8] sm:$0xf]
        %v776 = vld [vmem:[%s772 + $0xc] sm:$0xf]
        %v777 = vld [vmem:[%s772 + $0x10] sm:$0xf]
        %v778 = vld [vmem:[%s772 + $0x14] sm:$0xf]
        %v779 = vld [vmem:[%s772 + $0x18] sm:$0xf]
        %v780 = vld [vmem:[%s772 + $0x1c] sm:$0xf]
        %v781 = vld [vmem:[%s772 + $0x20] sm:$0xf]
        %v782 = vld [vmem:[%s772 + $0x24] sm:$0xf]
        %v783 = vld [vmem:[%s772 + $0x28] sm:$0xf]
        %v784 = vld [vmem:[%s772 + $0x2c] sm:$0xf]
        %v785 = vld [vmem:[%s772 + $0x30] sm:$0xf]
        %v786 = vld [vmem:[%s772 + $0x34] sm:$0xf]
        %v787 = vld [vmem:[%s772 + $0x38] sm:$0xf]
        %v788 = vld [vmem:[%s772 + $0x3c] sm:$0xf]
        %v789 = vld [vmem:[%s226] sm:$0xf]
        %v790 = vld [vmem:[%s226 + $0x4] sm:$0xf]
        %v791 = vld [vmem:[%s226 + $0x8] sm:$0xf]
        %v792 = vld [vmem:[%s226 + $0xc] sm:$0xf]
        %v809 = vunpack.c.l.b16 %v773
        %v810 = vunpack.c.l.b16 %v774
        %v811 = vunpack.c.l.b16 %v775
        %v812 = vunpack.c.l.b16 %v776
        %v813 = vunpack.c.l.b16 %v777
        %v814 = vunpack.c.l.b16 %v778
        %v815 = vunpack.c.l.b16 %v779
        %v816 = vunpack.c.l.b16 %v780
        %v817 = vunpack.c.l.b16 %v781
        %v818 = vunpack.c.l.b16 %v782
        %v819 = vunpack.c.l.b16 %v783
        %v820 = vunpack.c.l.b16 %v784
        %v821 = vunpack.c.l.b16 %v785
        %v822 = vunpack.c.l.b16 %v786
        %v823 = vunpack.c.l.b16 %v787
        %v824 = vunpack.c.l.b16 %v788
        %v825 = vpack.c.b16 %v810, %v809
        %v826 = vpack.c.b16 %v812, %v811
        %v827 = vpack.c.b16 %v814, %v813
        %v828 = vpack.c.b16 %v816, %v815
        %v829 = vpack.c.b16 %v818, %v817
        %v830 = vpack.c.b16 %v820, %v819
        %v831 = vpack.c.b16 %v822, %v821
        %v832 = vpack.c.b16 %v824, %v823
        %v837 = vunpack.c.l.b16 %v789
        %v838 = vunpack.c.l.b16 %v790
        %v839 = vunpack.c.l.b16 %v791
        %v840 = vunpack.c.l.b16 %v792
        %v841 = vpack.c.b16 %v838, %v837
        %v842 = vpack.c.b16 %v840, %v839
        %vm845 = vcmask 261120
        %v847 = vsel %vm845, %v825, 0
        %v850 = vsel %vm845, %v826, 0
        %v853 = vsel %vm845, %v827, 0
        %v856 = vsel %vm845, %v828, 0
        %v859 = vsel %vm845, %v829, 0
        %v862 = vsel %vm845, %v830, 0
        %v865 = vsel %vm845, %v831, 0
        %v868 = vsel %vm845, %v832, 0
        %870 = vmatprep.subr.bf16.mxu0 0
        %871 = vmatpush1.bf16.msra.mxu0 0
        %872 = vmatprep.subr.bf16.mxu0 0
        %873 = vmatpush1.bf16.msra.mxu0 0
        %874 = vmatprep.subr.bf16.mxu0 0
        %875 = vmatpush1.bf16.msra.mxu0 0
        %876 = vmatprep.subr.bf16.mxu0 0
        %877 = vmatpush1.bf16.msra.mxu0 0
        %878 = vmatprep.subr.bf16.mxu0 0
        %879 = vmatpush1.bf16.msra.mxu0 0
        %880 = vmatprep.subr.bf16.mxu0 0
        %881 = vmatpush1.bf16.msra.mxu0 0
        %882 = vmatprep.subr.bf16.mxu0 0
        %883 = vmatpush1.bf16.msra.mxu0 %v842
        %884 = vmatprep.subr.bf16.mxu0 0
        %885 = vmatpush1.bf16.msra.mxu0 %v841
        %886 = vmatprep.subr.bf16.mxu0 0
        %887 = vmatpush2.bf16.msra.mxu0 0
        %888 = vmatprep.subr.bf16.mxu0 0
        %889 = vmatpush2.bf16.msra.mxu0 0
        %890 = vmatprep.subr.bf16.mxu0 0
        %891 = vmatpush2.bf16.msra.mxu0 0
        %892 = vmatprep.subr.bf16.mxu0 0
        %893 = vmatpush2.bf16.msra.mxu0 0
        %894 = vmatprep.subr.bf16.mxu0 0
        %895 = vmatpush2.bf16.msra.mxu0 0
        %896 = vmatprep.subr.bf16.mxu0 0
        %897 = vmatpush2.bf16.msra.mxu0 0
        %898 = vmatprep.subr.bf16.mxu0 0
        %899 = vmatpush2.bf16.msra.mxu0 0
        %900 = vmatprep.subr.bf16.mxu0 0
        %901 = vmatpush2.bf16.msra.mxu0 0
        %902 = vmatprep.mubr.bf16.mxu0 0
        %903 = vmatmul.mubr.bf16.gmra.mxu0 %v847
        %v904 = vpop.f32.mrf.mxu0
        %v905 = vadd.f32 0.0, %v904
        %v906 = vpop.f32.mrf.mxu0
        %v907 = vpop.f32.mrf.mxu0
        %v908 = vadd.f32 0.0, %v907
        %v909 = vpop.f32.mrf.mxu0
        %910 = vmatprep.mubr.bf16.mxu0 0
        %911 = vmatmul.mubr.bf16.gmra.mxu0 %v850
        %v912 = vpop.f32.mrf.mxu0
        %v913 = vadd.f32 0.0, %v912
        %v914 = vpop.f32.mrf.mxu0
        %v915 = vpop.f32.mrf.mxu0
        %v916 = vadd.f32 0.0, %v915
        %v917 = vpop.f32.mrf.mxu0
        %918 = vmatprep.mubr.bf16.mxu0 0
        %919 = vmatmul.mubr.bf16.gmra.mxu0 %v853
        %v920 = vpop.f32.mrf.mxu0
        %v921 = vadd.f32 0.0, %v920
        %v922 = vpop.f32.mrf.mxu0
        %v923 = vpop.f32.mrf.mxu0
        %v924 = vadd.f32 0.0, %v923
        %v925 = vpop.f32.mrf.mxu0
        %926 = vmatprep.mubr.bf16.mxu0 0
        %927 = vmatmul.mubr.bf16.gmra.mxu0 %v856
        %v928 = vpop.f32.mrf.mxu0
        %v929 = vadd.f32 0.0, %v928
        %v930 = vpop.f32.mrf.mxu0
        %v931 = vpop.f32.mrf.mxu0
        %v932 = vadd.f32 0.0, %v931
        %v933 = vpop.f32.mrf.mxu0
        %934 = vmatprep.mubr.bf16.mxu0 0
        %935 = vmatmul.mubr.bf16.gmra.mxu0 %v859
        %v936 = vpop.f32.mrf.mxu0
        %v937 = vadd.f32 0.0, %v936
        %v938 = vpop.f32.mrf.mxu0
        %v939 = vpop.f32.mrf.mxu0
        %v940 = vadd.f32 0.0, %v939
        %v941 = vpop.f32.mrf.mxu0
        %942 = vmatprep.mubr.bf16.mxu0 0
        %943 = vmatmul.mubr.bf16.gmra.mxu0 %v862
        %v944 = vpop.f32.mrf.mxu0
        %v945 = vadd.f32 0.0, %v944
        %v946 = vpop.f32.mrf.mxu0
        %v947 = vpop.f32.mrf.mxu0
        %v948 = vadd.f32 0.0, %v947
        %v949 = vpop.f32.mrf.mxu0
        %950 = vmatprep.mubr.bf16.mxu0 0
        %951 = vmatmul.mubr.bf16.gmra.mxu0 %v865
        %v952 = vpop.f32.mrf.mxu0
        %v953 = vadd.f32 0.0, %v952
        %v954 = vpop.f32.mrf.mxu0
        %v955 = vpop.f32.mrf.mxu0
        %v956 = vadd.f32 0.0, %v955
        %v957 = vpop.f32.mrf.mxu0
        %958 = vmatprep.mubr.bf16.mxu0 0
        %959 = vmatmul.mubr.bf16.gmra.mxu0 %v868
        %v960 = vpop.f32.mrf.mxu0
        %v961 = vadd.f32 0.0, %v960
        %v962 = vpop.f32.mrf.mxu0
        %v963 = vpop.f32.mrf.mxu0
        %v964 = vadd.f32 0.0, %v963
        %v965 = vpop.f32.mrf.mxu0
        %966 = vdwg.mxu0
        %v967 = vmax.f32 %v905, 0.0
        %v968 = vmax.f32 %v908, 0.0
        %v969 = vmax.f32 %v913, 0.0
        %v970 = vmax.f32 %v916, 0.0
        %v971 = vmax.f32 %v921, 0.0
        %v972 = vmax.f32 %v924, 0.0
        %v973 = vmax.f32 %v929, 0.0
        %v974 = vmax.f32 %v932, 0.0
        %v975 = vmax.f32 %v937, 0.0
        %v976 = vmax.f32 %v940, 0.0
        %v977 = vmax.f32 %v945, 0.0
        %v978 = vmax.f32 %v948, 0.0
        %v979 = vmax.f32 %v953, 0.0
        %v980 = vmax.f32 %v956, 0.0
        %v981 = vmax.f32 %v961, 0.0
        %v982 = vmax.f32 %v964, 0.0
        %v983 = vpack.c.bf16 %v968, %v967
        %v984 = vpack.c.bf16 %v970, %v969
        %v985 = vpack.c.bf16 %v972, %v971
        %v986 = vpack.c.bf16 %v974, %v973
        %v987 = vpack.c.bf16 %v976, %v975
        %v988 = vpack.c.bf16 %v978, %v977
        %v989 = vpack.c.bf16 %v980, %v979
        %v990 = vpack.c.bf16 %v982, %v981
        %v991 = vld [vmem:[#allocation2] sm:$0xf]
        %v992 = vld [vmem:[#allocation2 + $0x4] sm:$0xf]
        %v993 = vld [vmem:[#allocation2 + $0x8] sm:$0xf]
        %v994 = vld [vmem:[#allocation2 + $0xc] sm:$0xf]
        %v995 = vld [vmem:[#allocation2 + $0x10] sm:$0xf]
        %v996 = vld [vmem:[#allocation2 + $0x14] sm:$0xf]
        %v997 = vld [vmem:[#allocation2 + $0x18] sm:$0xf]
        %v998 = vld [vmem:[#allocation2 + $0x1c] sm:$0xf]
        %v999 = vld [vmem:[#allocation2 + $0x20] sm:$0xf]
        %v1000 = vld [vmem:[#allocation2 + $0x24] sm:$0xf]
        %v1001 = vld [vmem:[#allocation2 + $0x28] sm:$0xf]
        %v1002 = vld [vmem:[#allocation2 + $0x2c] sm:$0xf]
        %v1003 = vld [vmem:[#allocation2 + $0x30] sm:$0xf]
        %v1004 = vld [vmem:[#allocation2 + $0x34] sm:$0xf]
        %v1005 = vld [vmem:[#allocation2 + $0x38] sm:$0xf]
        %v1006 = vld [vmem:[#allocation2 + $0x3c] sm:$0xf]
        %v1007 = vld [vmem:[#allocation2 + $0x40] sm:$0xf]
        %v1008 = vld [vmem:[#allocation2 + $0x44] sm:$0xf]
        %v1009 = vld [vmem:[#allocation2 + $0x48] sm:$0xf]
        %v1010 = vld [vmem:[#allocation2 + $0x4c] sm:$0xf]
        %v1011 = vld [vmem:[#allocation2 + $0x50] sm:$0xf]
        %v1012 = vld [vmem:[#allocation2 + $0x54] sm:$0xf]
        %v1013 = vld [vmem:[#allocation2 + $0x58] sm:$0xf]
        %v1014 = vld [vmem:[#allocation2 + $0x5c] sm:$0xf]
        %v1015 = vld [vmem:[#allocation2 + $0x60] sm:$0xf]
        %v1016 = vld [vmem:[#allocation2 + $0x64] sm:$0xf]
        %v1017 = vld [vmem:[#allocation2 + $0x68] sm:$0xf]
        %v1018 = vld [vmem:[#allocation2 + $0x6c] sm:$0xf]
        %v1019 = vld [vmem:[#allocation2 + $0x70] sm:$0xf]
        %v1020 = vld [vmem:[#allocation2 + $0x74] sm:$0xf]
        %v1021 = vld [vmem:[#allocation2 + $0x78] sm:$0xf]
        %v1022 = vld [vmem:[#allocation2 + $0x7c] sm:$0xf]
        %v1055 = vunpack.c.l.b16 %v991
        %v1056 = vunpack.c.l.b16 %v992
        %v1057 = vunpack.c.l.b16 %v993
        %v1058 = vunpack.c.l.b16 %v994
        %v1059 = vunpack.c.l.b16 %v995
        %v1060 = vunpack.c.l.b16 %v996
        %v1061 = vunpack.c.l.b16 %v997
        %v1062 = vunpack.c.l.b16 %v998
        %v1063 = vunpack.c.l.b16 %v999
        %v1064 = vunpack.c.l.b16 %v1000
        %v1065 = vunpack.c.l.b16 %v1001
        %v1066 = vunpack.c.l.b16 %v1002
        %v1067 = vunpack.c.l.b16 %v1003
        %v1068 = vunpack.c.l.b16 %v1004
        %v1069 = vunpack.c.l.b16 %v1005
        %v1070 = vunpack.c.l.b16 %v1006
        %v1071 = vunpack.c.l.b16 %v1007
        %v1072 = vunpack.c.l.b16 %v1008
        %v1073 = vunpack.c.l.b16 %v1009
        %v1074 = vunpack.c.l.b16 %v1010
        %v1075 = vunpack.c.l.b16 %v1011
        %v1076 = vunpack.c.l.b16 %v1012
        %v1077 = vunpack.c.l.b16 %v1013
        %v1078 = vunpack.c.l.b16 %v1014
        %v1079 = vunpack.c.l.b16 %v1015
        %v1080 = vunpack.c.l.b16 %v1016
        %v1081 = vunpack.c.l.b16 %v1017
        %v1082 = vunpack.c.l.b16 %v1018
        %v1083 = vunpack.c.l.b16 %v1019
        %v1084 = vunpack.c.l.b16 %v1020
        %v1085 = vunpack.c.l.b16 %v1021
        %v1086 = vunpack.c.l.b16 %v1022
        %v1087 = vpack.c.b16 %v1056, %v1055
        %v1088 = vpack.c.b16 %v1058, %v1057
        %v1089 = vpack.c.b16 %v1060, %v1059
        %v1090 = vpack.c.b16 %v1062, %v1061
        %v1091 = vpack.c.b16 %v1064, %v1063
        %v1092 = vpack.c.b16 %v1066, %v1065
        %v1093 = vpack.c.b16 %v1068, %v1067
        %v1094 = vpack.c.b16 %v1070, %v1069
        %v1095 = vpack.c.b16 %v1072, %v1071
        %v1096 = vpack.c.b16 %v1074, %v1073
        %v1097 = vpack.c.b16 %v1076, %v1075
        %v1098 = vpack.c.b16 %v1078, %v1077
        %v1099 = vpack.c.b16 %v1080, %v1079
        %v1100 = vpack.c.b16 %v1082, %v1081
        %v1101 = vpack.c.b16 %v1084, %v1083
        %v1102 = vpack.c.b16 %v1086, %v1085
        %1119 = vmatprep.subr.bf16.mxu0 0
        %1120 = vmatpush1.bf16.xpose.msra.mxu0 %v1094
        %1121 = vmatprep.subr.bf16.mxu0 0
        %1122 = vmatpush1.bf16.xpose.msra.mxu0 %v1093
        %1123 = vmatprep.subr.bf16.mxu0 0
        %1124 = vmatpush1.bf16.xpose.msra.mxu0 %v1092
        %1125 = vmatprep.subr.bf16.mxu0 0
        %1126 = vmatpush1.bf16.xpose.msra.mxu0 %v1091
        %1127 = vmatprep.subr.bf16.mxu0 0
        %1128 = vmatpush1.bf16.xpose.msra.mxu0 %v1090
        %1129 = vmatprep.subr.bf16.mxu0 0
        %1130 = vmatpush1.bf16.xpose.msra.mxu0 %v1089
        %1131 = vmatprep.subr.bf16.mxu0 0
        %1132 = vmatpush1.bf16.xpose.msra.mxu0 %v1088
        %1133 = vmatprep.subr.bf16.mxu0 0
        %1134 = vmatpush1.bf16.xpose.msra.mxu0 %v1087
        %1135 = vmatprep.subr.bf16.mxu0 0
        %1136 = vmatpush2.bf16.xpose.msra.mxu0 %v1102
        %1137 = vmatprep.subr.bf16.mxu0 0
        %1138 = vmatpush2.bf16.xpose.msra.mxu0 %v1101
        %1139 = vmatprep.subr.bf16.mxu0 0
        %1140 = vmatpush2.bf16.xpose.msra.mxu0 %v1100
        %1141 = vmatprep.subr.bf16.mxu0 0
        %1142 = vmatpush2.bf16.xpose.msra.mxu0 %v1099
        %1143 = vmatprep.subr.bf16.mxu0 0
        %1144 = vmatpush2.bf16.xpose.msra.mxu0 %v1098
        %1145 = vmatprep.subr.bf16.mxu0 0
        %1146 = vmatpush2.bf16.xpose.msra.mxu0 %v1097
        %1147 = vmatprep.subr.bf16.mxu0 0
        %1148 = vmatpush2.bf16.xpose.msra.mxu0 %v1096
        %1149 = vmatprep.subr.bf16.mxu0 0
        %1150 = vmatpush2.bf16.xpose.msra.mxu0 %v1095
        %1151 = vmatprep.mubr.bf16.mxu0 0
        %1152 = vmatmul.mubr.bf16.gmra.mxu0 %v983
        %v1153 = vpop.f32.mrf.mxu0
        %v1154 = vadd.f32 0.0, %v1153
        %v1155 = vpop.f32.mrf.mxu0
        %v1156 = vadd.f32 0.0, %v1155
        %v1157 = vpop.f32.mrf.mxu0
        %v1158 = vadd.f32 0.0, %v1157
        %v1159 = vpop.f32.mrf.mxu0
        %v1160 = vadd.f32 0.0, %v1159
        %1161 = vmatprep.mubr.bf16.mxu0 0
        %1162 = vmatmul.mubr.bf16.gmra.mxu0 %v984
        %v1163 = vpop.f32.mrf.mxu0
        %v1164 = vadd.f32 0.0, %v1163
        %v1165 = vpop.f32.mrf.mxu0
        %v1166 = vadd.f32 0.0, %v1165
        %v1167 = vpop.f32.mrf.mxu0
        %v1168 = vadd.f32 0.0, %v1167
        %v1169 = vpop.f32.mrf.mxu0
        %v1170 = vadd.f32 0.0, %v1169
        %1171 = vmatprep.mubr.bf16.mxu0 0
        %1172 = vmatmul.mubr.bf16.gmra.mxu0 %v985
        %v1173 = vpop.f32.mrf.mxu0
        %v1174 = vadd.f32 0.0, %v1173
        %v1175 = vpop.f32.mrf.mxu0
        %v1176 = vadd.f32 0.0, %v1175
        %v1177 = vpop.f32.mrf.mxu0
        %v1178 = vadd.f32 0.0, %v1177
        %v1179 = vpop.f32.mrf.mxu0
        %v1180 = vadd.f32 0.0, %v1179
        %1181 = vmatprep.mubr.bf16.mxu0 0
        %1182 = vmatmul.mubr.bf16.gmra.mxu0 %v986
        %v1183 = vpop.f32.mrf.mxu0
        %v1184 = vadd.f32 0.0, %v1183
        %v1185 = vpop.f32.mrf.mxu0
        %v1186 = vadd.f32 0.0, %v1185
        %v1187 = vpop.f32.mrf.mxu0
        %v1188 = vadd.f32 0.0, %v1187
        %v1189 = vpop.f32.mrf.mxu0
        %v1190 = vadd.f32 0.0, %v1189
        %1191 = vmatprep.mubr.bf16.mxu0 0
        %1192 = vmatmul.mubr.bf16.gmra.mxu0 %v987
        %v1193 = vpop.f32.mrf.mxu0
        %v1194 = vadd.f32 0.0, %v1193
        %v1195 = vpop.f32.mrf.mxu0
        %v1196 = vadd.f32 0.0, %v1195
        %v1197 = vpop.f32.mrf.mxu0
        %v1198 = vadd.f32 0.0, %v1197
        %v1199 = vpop.f32.mrf.mxu0
        %v1200 = vadd.f32 0.0, %v1199
        %1201 = vmatprep.mubr.bf16.mxu0 0
        %1202 = vmatmul.mubr.bf16.gmra.mxu0 %v988
        %v1203 = vpop.f32.mrf.mxu0
        %v1204 = vadd.f32 0.0, %v1203
        %v1205 = vpop.f32.mrf.mxu0
        %v1206 = vadd.f32 0.0, %v1205
        %v1207 = vpop.f32.mrf.mxu0
        %v1208 = vadd.f32 0.0, %v1207
        %v1209 = vpop.f32.mrf.mxu0
        %v1210 = vadd.f32 0.0, %v1209
        %1211 = vmatprep.mubr.bf16.mxu0 0
        %1212 = vmatmul.mubr.bf16.gmra.mxu0 %v989
        %v1213 = vpop.f32.mrf.mxu0
        %v1214 = vadd.f32 0.0, %v1213
        %v1215 = vpop.f32.mrf.mxu0
        %v1216 = vadd.f32 0.0, %v1215
        %v1217 = vpop.f32.mrf.mxu0
        %v1218 = vadd.f32 0.0, %v1217
        %v1219 = vpop.f32.mrf.mxu0
        %v1220 = vadd.f32 0.0, %v1219
        %1221 = vmatprep.mubr.bf16.mxu0 0
        %1222 = vmatmul.mubr.bf16.gmra.mxu0 %v990
        %v1223 = vpop.f32.mrf.mxu0
        %v1224 = vadd.f32 0.0, %v1223
        %v1225 = vpop.f32.mrf.mxu0
        %v1226 = vadd.f32 0.0, %v1225
        %v1227 = vpop.f32.mrf.mxu0
        %v1228 = vadd.f32 0.0, %v1227
        %v1229 = vpop.f32.mrf.mxu0
        %v1230 = vadd.f32 0.0, %v1229
        %1231 = vdwg.mxu0
        %v1232 = vmax.f32 %v1154, %v1156
        %1233 = vmax.xlane.f32.xlu0 %v1232
        %v1234 = vpop.xlane.xlu0 %1233
        %v1235 = vmax.f32 %v1158, %v1160
        %1236 = vmax.xlane.f32.xlu0 %v1235
        %v1237 = vpop.xlane.xlu0 %1236
        %v1238 = vmax.f32 %v1164, %v1166
        %1239 = vmax.xlane.f32.xlu0 %v1238
        %v1240 = vpop.xlane.xlu0 %1239
        %v1241 = vmax.f32 %v1168, %v1170
        %1242 = vmax.xlane.f32.xlu0 %v1241
        %v1243 = vpop.xlane.xlu0 %1242
        %v1244 = vmax.f32 %v1174, %v1176
        %1245 = vmax.xlane.f32.xlu0 %v1244
        %v1246 = vpop.xlane.xlu0 %1245
        %v1247 = vmax.f32 %v1178, %v1180
        %1248 = vmax.xlane.f32.xlu0 %v1247
        %v1249 = vpop.xlane.xlu0 %1248
        %v1250 = vmax.f32 %v1184, %v1186
        %1251 = vmax.xlane.f32.xlu0 %v1250
        %v1252 = vpop.xlane.xlu0 %1251
        %v1253 = vmax.f32 %v1188, %v1190
        %1254 = vmax.xlane.f32.xlu0 %v1253
        %v1255 = vpop.xlane.xlu0 %1254
        %v1256 = vmax.f32 %v1194, %v1196
        %1257 = vmax.xlane.f32.xlu0 %v1256
        %v1258 = vpop.xlane.xlu0 %1257
        %v1259 = vmax.f32 %v1198, %v1200
        %1260 = vmax.xlane.f32.xlu0 %v1259
        %v1261 = vpop.xlane.xlu0 %1260
        %v1262 = vmax.f32 %v1204, %v1206
        %1263 = vmax.xlane.f32.xlu0 %v1262
        %v1264 = vpop.xlane.xlu0 %1263
        %v1265 = vmax.f32 %v1208, %v1210
        %1266 = vmax.xlane.f32.xlu0 %v1265
        %v1267 = vpop.xlane.xlu0 %1266
        %v1268 = vmax.f32 %v1214, %v1216
        %1269 = vmax.xlane.f32.xlu0 %v1268
        %v1270 = vpop.xlane.xlu0 %1269
        %v1271 = vmax.f32 %v1218, %v1220
        %1272 = vmax.xlane.f32.xlu0 %v1271
        %v1273 = vpop.xlane.xlu0 %1272
        %v1274 = vmax.f32 %v1224, %v1226
        %1275 = vmax.xlane.f32.xlu0 %v1274
        %v1276 = vpop.xlane.xlu0 %1275
        %v1277 = vmax.f32 %v1228, %v1230
        %1278 = vmax.xlane.f32.xlu0 %v1277
        %v1279 = vpop.xlane.xlu0 %1278
        %v1280 = vsub.f32 %v1154, %v1234
        %v1281 = vsub.f32 %v1156, %v1234
        %v1282 = vsub.f32 %v1158, %v1237
        %v1283 = vsub.f32 %v1160, %v1237
        %v1284 = vsub.f32 %v1164, %v1240
        %v1285 = vsub.f32 %v1166, %v1240
        %v1286 = vsub.f32 %v1168, %v1243
        %v1287 = vsub.f32 %v1170, %v1243
        %v1288 = vsub.f32 %v1174, %v1246
        %v1289 = vsub.f32 %v1176, %v1246
        %v1290 = vsub.f32 %v1178, %v1249
        %v1291 = vsub.f32 %v1180, %v1249
        %v1292 = vsub.f32 %v1184, %v1252
        %v1293 = vsub.f32 %v1186, %v1252
        %v1294 = vsub.f32 %v1188, %v1255
        %v1295 = vsub.f32 %v1190, %v1255
        %v1296 = vsub.f32 %v1194, %v1258
        %v1297 = vsub.f32 %v1196, %v1258
        %v1298 = vsub.f32 %v1198, %v1261
        %v1299 = vsub.f32 %v1200, %v1261
        %v1300 = vsub.f32 %v1204, %v1264
        %v1301 = vsub.f32 %v1206, %v1264
        %v1302 = vsub.f32 %v1208, %v1267
        %v1303 = vsub.f32 %v1210, %v1267
        %v1304 = vsub.f32 %v1214, %v1270
        %v1305 = vsub.f32 %v1216, %v1270
        %v1306 = vsub.f32 %v1218, %v1273
        %v1307 = vsub.f32 %v1220, %v1273
        %v1308 = vsub.f32 %v1224, %v1276
        %v1309 = vsub.f32 %v1226, %v1276
        %v1310 = vsub.f32 %v1228, %v1279
        %v1311 = vsub.f32 %v1230, %v1279
        %v1312 = vmul.f32 %v1280, 1.442695
        %v1313 = vpow.pop %v1312
        %v1314 = vmul.f32 %v1281, 1.442695
        %v1315 = vpow.pop %v1314
        %v1316 = vmul.f32 %v1282, 1.442695
        %v1317 = vpow.pop %v1316
        %v1318 = vmul.f32 %v1283, 1.442695
        %v1319 = vpow.pop %v1318
        %v1320 = vmul.f32 %v1284, 1.442695
        %v1321 = vpow.pop %v1320
        %v1322 = vmul.f32 %v1285, 1.442695
        %v1323 = vpow.pop %v1322
        %v1324 = vmul.f32 %v1286, 1.442695
        %v1325 = vpow.pop %v1324
        %v1326 = vmul.f32 %v1287, 1.442695
        %v1327 = vpow.pop %v1326
        %v1328 = vmul.f32 %v1288, 1.442695
        %v1329 = vpow.pop %v1328
        %v1330 = vmul.f32 %v1289, 1.442695
        %v1331 = vpow.pop %v1330
        %v1332 = vmul.f32 %v1290, 1.442695
        %v1333 = vpow.pop %v1332
        %v1334 = vmul.f32 %v1291, 1.442695
        %v1335 = vpow.pop %v1334
        %v1336 = vmul.f32 %v1292, 1.442695
        %v1337 = vpow.pop %v1336
        %v1338 = vmul.f32 %v1293, 1.442695
        %v1339 = vpow.pop %v1338
        %v1340 = vmul.f32 %v1294, 1.442695
        %v1341 = vpow.pop %v1340
        %v1342 = vmul.f32 %v1295, 1.442695
        %v1343 = vpow.pop %v1342
        %v1344 = vmul.f32 %v1296, 1.442695
        %v1345 = vpow.pop %v1344
        %v1346 = vmul.f32 %v1297, 1.442695
        %v1347 = vpow.pop %v1346
        %v1348 = vmul.f32 %v1298, 1.442695
        %v1349 = vpow.pop %v1348
        %v1350 = vmul.f32 %v1299, 1.442695
        %v1351 = vpow.pop %v1350
        %v1352 = vmul.f32 %v1300, 1.442695
        %v1353 = vpow.pop %v1352
        %v1354 = vmul.f32 %v1301, 1.442695
        %v1355 = vpow.pop %v1354
        %v1356 = vmul.f32 %v1302, 1.442695
        %v1357 = vpow.pop %v1356
        %v1358 = vmul.f32 %v1303, 1.442695
        %v1359 = vpow.pop %v1358
        %v1360 = vmul.f32 %v1304, 1.442695
        %v1361 = vpow.pop %v1360
        %v1362 = vmul.f32 %v1305, 1.442695
        %v1363 = vpow.pop %v1362
        %v1364 = vmul.f32 %v1306, 1.442695
        %v1365 = vpow.pop %v1364
        %v1366 = vmul.f32 %v1307, 1.442695
        %v1367 = vpow.pop %v1366
        %v1368 = vmul.f32 %v1308, 1.442695
        %v1369 = vpow.pop %v1368
        %v1370 = vmul.f32 %v1309, 1.442695
        %v1371 = vpow.pop %v1370
        %v1372 = vmul.f32 %v1310, 1.442695
        %v1373 = vpow.pop %v1372
        %v1374 = vmul.f32 %v1311, 1.442695
        %v1375 = vpow.pop %v1374
        %v1376 = vadd.f32 %v1313, %v1315
        %1377 = vadd.xlane.f32.xlu0 %v1376
        %v1378 = vpop.xlane.xlu0 %1377
        %v1379 = vadd.f32 %v1317, %v1319
        %1380 = vadd.xlane.f32.xlu0 %v1379
        %v1381 = vpop.xlane.xlu0 %1380
        %v1382 = vadd.f32 %v1321, %v1323
        %1383 = vadd.xlane.f32.xlu0 %v1382
        %v1384 = vpop.xlane.xlu0 %1383
        %v1385 = vadd.f32 %v1325, %v1327
        %1386 = vadd.xlane.f32.xlu0 %v1385
        %v1387 = vpop.xlane.xlu0 %1386
        %v1388 = vadd.f32 %v1329, %v1331
        %1389 = vadd.xlane.f32.xlu0 %v1388
        %v1390 = vpop.xlane.xlu0 %1389
        %v1391 = vadd.f32 %v1333, %v1335
        %1392 = vadd.xlane.f32.xlu0 %v1391
        %v1393 = vpop.xlane.xlu0 %1392
        %v1394 = vadd.f32 %v1337, %v1339
        %1395 = vadd.xlane.f32.xlu0 %v1394
        %v1396 = vpop.xlane.xlu0 %1395
        %v1397 = vadd.f32 %v1341, %v1343
        %1398 = vadd.xlane.f32.xlu0 %v1397
        %v1399 = vpop.xlane.xlu0 %1398
        %v1400 = vadd.f32 %v1345, %v1347
        %1401 = vadd.xlane.f32.xlu0 %v1400
        %v1402 = vpop.xlane.xlu0 %1401
        %v1403 = vadd.f32 %v1349, %v1351
        %1404 = vadd.xlane.f32.xlu0 %v1403
        %v1405 = vpop.xlane.xlu0 %1404
        %v1406 = vadd.f32 %v1353, %v1355
        %1407 = vadd.xlane.f32.xlu0 %v1406
        %v1408 = vpop.xlane.xlu0 %1407
        %v1409 = vadd.f32 %v1357, %v1359
        %1410 = vadd.xlane.f32.xlu0 %v1409
        %v1411 = vpop.xlane.xlu0 %1410
        %v1412 = vadd.f32 %v1361, %v1363
        %1413 = vadd.xlane.f32.xlu0 %v1412
        %v1414 = vpop.xlane.xlu0 %1413
        %v1415 = vadd.f32 %v1365, %v1367
        %1416 = vadd.xlane.f32.xlu0 %v1415
        %v1417 = vpop.xlane.xlu0 %1416
        %v1418 = vadd.f32 %v1369, %v1371
        %1419 = vadd.xlane.f32.xlu0 %v1418
        %v1420 = vpop.xlane.xlu0 %1419
        %v1421 = vadd.f32 %v1373, %v1375
        %1422 = vadd.xlane.f32.xlu0 %v1421
        %v1423 = vpop.xlane.xlu0 %1422
        %v1424 = vrcp.pop %v1378
        %v1425 = vrcp.pop %v1381
        %v1426 = vrcp.pop %v1384
        %v1427 = vrcp.pop %v1387
        %v1428 = vrcp.pop %v1390
        %v1429 = vrcp.pop %v1393
        %v1430 = vrcp.pop %v1396
        %v1431 = vrcp.pop %v1399
        %v1432 = vrcp.pop %v1402
        %v1433 = vrcp.pop %v1405
        %v1434 = vrcp.pop %v1408
        %v1435 = vrcp.pop %v1411
        %v1436 = vrcp.pop %v1414
        %v1437 = vrcp.pop %v1417
        %v1438 = vrcp.pop %v1420
        %v1439 = vrcp.pop %v1423
        %v1440 = vmul.f32 %v1378, %v1424
        %v1441 = vmul.f32 %v1381, %v1425
        %v1442 = vmul.f32 %v1384, %v1426
        %v1443 = vmul.f32 %v1387, %v1427
        %v1444 = vmul.f32 %v1390, %v1428
        %v1445 = vmul.f32 %v1393, %v1429
        %v1446 = vmul.f32 %v1396, %v1430
        %v1447 = vmul.f32 %v1399, %v1431
        %v1448 = vmul.f32 %v1402, %v1432
        %v1449 = vmul.f32 %v1405, %v1433
        %v1450 = vmul.f32 %v1408, %v1434
        %v1451 = vmul.f32 %v1411, %v1435
        %v1452 = vmul.f32 %v1414, %v1436
        %v1453 = vmul.f32 %v1417, %v1437
        %v1454 = vmul.f32 %v1420, %v1438
        %v1455 = vmul.f32 %v1423, %v1439
        %v1456 = vsub.f32 2.0, %v1440
        %v1457 = vsub.f32 2.0, %v1441
        %v1458 = vsub.f32 2.0, %v1442
        %v1459 = vsub.f32 2.0, %v1443
        %v1460 = vsub.f32 2.0, %v1444
        %v1461 = vsub.f32 2.0, %v1445
        %v1462 = vsub.f32 2.0, %v1446
        %v1463 = vsub.f32 2.0, %v1447
        %v1464 = vsub.f32 2.0, %v1448
        %v1465 = vsub.f32 2.0, %v1449
        %v1466 = vsub.f32 2.0, %v1450
        %v1467 = vsub.f32 2.0, %v1451
        %v1468 = vsub.f32 2.0, %v1452
        %v1469 = vsub.f32 2.0, %v1453
        %v1470 = vsub.f32 2.0, %v1454
        %v1471 = vsub.f32 2.0, %v1455
        %v1472 = vmul.f32 %v1424, %v1456
        %v1473 = vmul.f32 %v1425, %v1457
        %v1474 = vmul.f32 %v1426, %v1458
        %v1475 = vmul.f32 %v1427, %v1459
        %v1476 = vmul.f32 %v1428, %v1460
        %v1477 = vmul.f32 %v1429, %v1461
        %v1478 = vmul.f32 %v1430, %v1462
        %v1479 = vmul.f32 %v1431, %v1463
        %v1480 = vmul.f32 %v1432, %v1464
        %v1481 = vmul.f32 %v1433, %v1465
        %v1482 = vmul.f32 %v1434, %v1466
        %v1483 = vmul.f32 %v1435, %v1467
        %v1484 = vmul.f32 %v1436, %v1468
        %v1485 = vmul.f32 %v1437, %v1469
        %v1486 = vmul.f32 %v1438, %v1470
        %v1487 = vmul.f32 %v1439, %v1471
        %v1488 = vmul.f32 %v1313, %v1472
        %v1489 = vmul.f32 %v1315, %v1472
        %v1490 = vmul.f32 %v1317, %v1473
        %v1491 = vmul.f32 %v1319, %v1473
        %v1492 = vmul.f32 %v1321, %v1474
        %v1493 = vmul.f32 %v1323, %v1474
        %v1494 = vmul.f32 %v1325, %v1475
        %v1495 = vmul.f32 %v1327, %v1475
        %v1496 = vmul.f32 %v1329, %v1476
        %v1497 = vmul.f32 %v1331, %v1476
        %v1498 = vmul.f32 %v1333, %v1477
        %v1499 = vmul.f32 %v1335, %v1477
        %v1500 = vmul.f32 %v1337, %v1478
        %v1501 = vmul.f32 %v1339, %v1478
        %v1502 = vmul.f32 %v1341, %v1479
        %v1503 = vmul.f32 %v1343, %v1479
        %v1504 = vmul.f32 %v1345, %v1480
        %v1505 = vmul.f32 %v1347, %v1480
        %v1506 = vmul.f32 %v1349, %v1481
        %v1507 = vmul.f32 %v1351, %v1481
        %v1508 = vmul.f32 %v1353, %v1482
        %v1509 = vmul.f32 %v1355, %v1482
        %v1510 = vmul.f32 %v1357, %v1483
        %v1511 = vmul.f32 %v1359, %v1483
        %v1512 = vmul.f32 %v1361, %v1484
        %v1513 = vmul.f32 %v1363, %v1484
        %v1514 = vmul.f32 %v1365, %v1485
        %v1515 = vmul.f32 %v1367, %v1485
        %v1516 = vmul.f32 %v1369, %v1486
        %v1517 = vmul.f32 %v1371, %v1486
        %v1518 = vmul.f32 %v1373, %v1487
        %v1519 = vmul.f32 %v1375, %v1487
        %1520 = vst [vmem:[%s216] sm:$0xff] %v1488
        %1521 = vst [vmem:[%s216 + $0x8] sm:$0xff] %v1489
        %1522 = vst [vmem:[%s216 + $0x10] sm:$0xff] %v1490
        %1523 = vst [vmem:[%s216 + $0x18] sm:$0xff] %v1491
        %1524 = vst [vmem:[%s216 + $0x20] sm:$0xff] %v1492
        %1525 = vst [vmem:[%s216 + $0x28] sm:$0xff] %v1493
        %1526 = vst [vmem:[%s216 + $0x30] sm:$0xff] %v1494
        %1527 = vst [vmem:[%s216 + $0x38] sm:$0xff] %v1495
        %1528 = vst [vmem:[%s216 + $0x40] sm:$0xff] %v1496
        %1529 = vst [vmem:[%s216 + $0x48] sm:$0xff] %v1497
        %1530 = vst [vmem:[%s216 + $0x50] sm:$0xff] %v1498
        %1531 = vst [vmem:[%s216 + $0x58] sm:$0xff] %v1499
        %1532 = vst [vmem:[%s216 + $0x60] sm:$0xff] %v1500
        %1533 = vst [vmem:[%s216 + $0x68] sm:$0xff] %v1501
        %1534 = vst [vmem:[%s216 + $0x70] sm:$0xff] %v1502
        %1535 = vst [vmem:[%s216 + $0x78] sm:$0xff] %v1503
        %1536 = vst [vmem:[%s216 + $0x80] sm:$0xff] %v1504
        %1537 = vst [vmem:[%s216 + $0x88] sm:$0xff] %v1505
        %1538 = vst [vmem:[%s216 + $0x90] sm:$0xff] %v1506
        %1539 = vst [vmem:[%s216 + $0x98] sm:$0xff] %v1507
        %1540 = vst [vmem:[%s216 + $0xa0] sm:$0xff] %v1508
        %1541 = vst [vmem:[%s216 + $0xa8] sm:$0xff] %v1509
        %1542 = vst [vmem:[%s216 + $0xb0] sm:$0xff] %v1510
        %1543 = vst [vmem:[%s216 + $0xb8] sm:$0xff] %v1511
        %1544 = vst [vmem:[%s216 + $0xc0] sm:$0xff] %v1512
        %1545 = vst [vmem:[%s216 + $0xc8] sm:$0xff] %v1513
        %1546 = vst [vmem:[%s216 + $0xd0] sm:$0xff] %v1514
        %1547 = vst [vmem:[%s216 + $0xd8] sm:$0xff] %v1515
        %1548 = vst [vmem:[%s216 + $0xe0] sm:$0xff] %v1516
        %1549 = vst [vmem:[%s216 + $0xe8] sm:$0xff] %v1517
        %1550 = vst [vmem:[%s216 + $0xf0] sm:$0xff] %v1518
        %1551 = vst [vmem:[%s216 + $0xf8] sm:$0xff] %v1519
        %s1552 = sand.u32 %s126, 1
        %s1553 = scalar_lea.sflag [#allocation4], %s1552
        %s1554 = sand.u32 %s126, 1
        %s1555 = smul.addr %s1554, 256
        %s1556 = scalar_lea.vmem [#allocation3], %s1555
        // Predicated region
        $region37: #{tpu_custom_call.1} parent=31 // pred_check
          %p1557 = pneg %p136
        $region38: #{tpu_custom_call.1} parent=31 // pred_check_branch
          %1559 = sbr.rel (%p1557) target = $region40
        $region39: #{tpu_custom_call.1} parent=31 // pred_region
          %s1560 = smul.u32 16, %s24
          %s1562 = ssub.s32 4096, 4096
          %1563 = vsyncadd %s1553, %s1562
          %s1564 = smul.addr %s1560, 2
          %s1565 = smul.addr %s23, 64
          %s1566 = sadd.s32 %s1564, %s1565
          %s1567 = smul.addr %s22, 128
          %s1568 = sadd.s32 %s1566, %s1567
          %s1569 = smul.addr %s1568, 128
          %s1570 = scalar_lea.hbm %s3, %s1569
          %s1571 = sshll.u32 %s1556, 4
          %s1572 = int_to_ptr.vmem [resolvable:$true] %s1571
          %1577 = dma.vmem_to_hbm [thread:$0]  %s1572, 4096, %s1570, %s1553, 256, 256, 16
        $region40: #{tpu_custom_call.1} parent=31 // pred_fallthru
          _
      $region32: #{tpu_custom_call.1} parent=5 // pred_fallthru
        _
      %p1578 = scmp.le.s32.totalorder 2, %s12
      // Predicated region
      $region41: #{tpu_custom_call.1} parent=5 // pred_check
        %p1579 = pneg %p1578
      $region42: #{tpu_custom_call.1} parent=5 // pred_check_branch
        %1581 = sbr.rel (%p1579) target = $region44
      $region43: #{tpu_custom_call.1} parent=5 // pred_region
        %s1582 = ssub.s32 %s12, 2
        // Predicated region
        $region45: #{tpu_custom_call.1} parent=43 // pred_check
          %p1583 = pneg %p142
        $region46: #{tpu_custom_call.1} parent=43 // pred_check_branch
          %1585 = sbr.rel (%p1583) target = $region48
        $region47: #{tpu_custom_call.1} parent=43 // pred_region
          %s1586 = sand.u32 %s127, 1
          %s1587 = scalar_lea.sflag [#allocation4], %s1586
          %s1588 = sand.u32 %s127, 1
          %s1589 = smul.addr %s1588, 256
          %s1590 = scalar_lea.vmem [#allocation3], %s1589
          %1591 = dma.done %s1587, 4096
        $region48: #{tpu_custom_call.1} parent=43 // pred_fallthru
          _
      $region44: #{tpu_custom_call.1} parent=5 // pred_fallthru
        _
    $region6: #{tpu_custom_call.1} parent=1 // loop_footer
      %s16 = sadd.s32 1, %s12
    $region7: #{tpu_custom_call.1} parent=1 // loop_footer_branch
      %11 = sbr.rel target = $region3
    $region8: #{tpu_custom_call.1} parent=1 // loop_exit
      _
    %1592 = vsyncpa [#allocation4], 1
    %s1593 = scalar_lea.sflag [#allocation4], 1
    %1594 = vsyncpa %s1593, 1

// kernel: tpu_custom_call.1
$region0: #{tpu_custom_call.1}
  #allocation0 [shape = 'u32[]', space=smem, size = 0x4, offset = 0x4, fixed_abs, tag = 'smem constant byte address 0x4 - core index']
  #allocation1 [shape = 'u32[144,128]{1,0:T(1,128)}', space=vmem, size = 0x12000, scoped, tag = 'internal scratch']
  #allocation2 [shape = 'bf16[256,128]{1,0:T(8,128)(2,1)}', space=vmem, size = 0x10000, scoped, tag = 'scratch operand']
  %s0 = inlined_call_operand.vmem [shape: bf16[2,256,32], index: 0, kind: input, shape index: {}]
  %s1 = inlined_call_operand.vmem [shape: bf16[2,32,128], index: 1, kind: input, shape index: {}]
  %s2 = inlined_call_operand.vmem [shape: bf16[2,32,128], index: 2, kind: input, shape index: {}]
  %s3 = inlined_call_operand.hbm [shape: f32[2,2,256,256], index: 3, kind: output, shape index: {}]
  %s4 = sld [smem:[#allocation0]]
  $region49: #{tpu_custom_call.1} parent=0
    _
  %s6 = ssub.s32 1, %s4
  %s7 = scalar_select 0, %s6, %s4
  $region1: #{tpu_custom_call.1} parent=0
    #allocation3 [shape = 'u8[262144]{0}', space=vmem, size = 0x40000, scoped, tag = 'output window, operand 0']
    #allocation4 [shape = 's32[2]{0}', space=sflag, size = 0x8, scoped, tag = 'scoped memory for tpu_custom_call.1']
    %8 = vsyncpa [#allocation4], 0
    %s9 = scalar_lea.sflag [#allocation4], 1
    %10 = vsyncpa %s9, 0
    loop: start=0, step=1, limit=10
    $region2: #{tpu_custom_call.1} parent=1 // loop_pre_header
      _
    $region3: #{tpu_custom_call.1} parent=1 // loop_header
      %s12 = sphi 0, %s16
      %p13 = scmp.ge.s32.totalorder %s12, 10
      %s19 = sphi 0, %s38
      %s20 = sphi 0, %s34
      %s21 = sphi 0, %s30
      %s22 = sphi 0, %s19
      %s23 = sphi 0, %s20
      %s24 = sphi 0, %s21
      %s25 = sphi 0, %s22
      %s26 = sphi 0, %s23
      %s27 = sphi 0, %s24
      %s41 = sphi 0, %s43
      %s44 = sphi 0, %s41
      %s45 = sphi 0, %s44
      %s61 = sphi 0, %s45
      %s67 = sphi 0, %s69
      %s70 = sphi 0, %s67
      %s71 = sphi 0, %s70
      %s87 = sphi 0, %s71
      %s93 = sphi 0, %s95
      %s96 = sphi 0, %s93
      %s97 = sphi 0, %s96
      %s113 = sphi 0, %s97
      %s123 = sphi 0, %s125
      %s126 = sphi 0, %s123
      %s127 = sphi 0, %s126
      %s143 = sphi 0, %s127
    $region4: #{tpu_custom_call.1} parent=1 // loop_header_branch
      %15 = sbr.rel (%p13) target = $region8
    $region5: #{tpu_custom_call.1} parent=1 // loop_body
      %s17 = ssub.s32 %s12, 1
      %s18 = ssub.s32 %s12, 2
      %s28 = sadd.s32 1, %s21
      %p29 = scmp.ge.s32.totalorder %s28, 2
      %s30 = scalar_select %p29, 0, %s28
      %s31 = sadd.s32 1, %s20
      %s32 = scalar_select %p29, %s31, %s20
      %p33 = scmp.ge.s32.totalorder %s32, 2
      %s34 = scalar_select %p33, 0, %s32
      %s35 = sadd.s32 1, %s19
      %s36 = scalar_select %p33, %s35, %s19
      %p37 = scmp.ge.s32.totalorder %s36, 2
      %s38 = scalar_select %p37, 0, %s36
      %s39 = ssub.s32 %s19, %s38
      %p40 = scmp.eq.s32.totalorder %s39, 0
      %s42 = sadd.s32 %s41, 1
      %s43 = scalar_select %p40, %s41, %s42
      %p46 = pneg %p40
      %p47 = scmp.eq.s32.totalorder %s12, 7
      %p48 = por %p46, %p47
      %p49 = scmp.ne.s32.totalorder %s41, %s44
      %p50 = scmp.eq.s32.totalorder %s12, 0
      %p51 = por %p49, %p50
      %p52 = scmp.ne.s32.totalorder %s41, %s44
      %p53 = scmp.eq.s32.totalorder %s17, 7
      %p54 = por %p52, %p53
      %p55 = scmp.ne.s32.totalorder %s44, %s45
      %p56 = scmp.eq.s32.totalorder %s17, 0
      %p57 = por %p55, %p56
      %p58 = scmp.ne.s32.totalorder %s44, %s45
      %p59 = scmp.eq.s32.totalorder %s18, 7
      %p60 = por %p58, %p59
      %p62 = scmp.ne.s32.totalorder %s45, %s61
      %p63 = scmp.eq.s32.totalorder %s18, 0
      %p64 = por %p62, %p63
      %s65 = ssub.s32 %s20, %s34
      %p66 = scmp.eq.s32.totalorder %s65, 0
      %s68 = sadd.s32 %s67, 1
      %s69 = scalar_select %p66, %s67, %s68
      %p72 = pneg %p66
      %p73 = scmp.eq.s32.totalorder %s12, 7
      %p74 = por %p72, %p73
      %p75 = scmp.ne.s32.totalorder %s67, %s70
      %p76 = scmp.eq.s32.totalorder %s12, 0
      %p77 = por %p75, %p76
      %p78 = scmp.ne.s32.totalorder %s67, %s70
      %p79 = scmp.eq.s32.totalorder %s17, 7
      %p80 = por %p78, %p79
      %p81 = scmp.ne.s32.totalorder %s70, %s71
      %p82 = scmp.eq.s32.totalorder %s17, 0
      %p83 = por %p81, %p82
      %p84 = scmp.ne.s32.totalorder %s70, %s71
      %p85 = scmp.eq.s32.totalorder %s18, 7
      %p86 = por %p84, %p85
      %p88 = scmp.ne.s32.totalorder %s71, %s87
      %p89 = scmp.eq.s32.totalorder %s18, 0
      %p90 = por %p88, %p89
      %s91 = ssub.s32 %s20, %s34
      %p92 = scmp.eq.s32.totalorder %s91, 0
      %s94 = sadd.s32 %s93, 1
      %s95 = scalar_select %p92, %s93, %s94
      %p98 = pneg %p92
      %p99 = scmp.eq.s32.totalorder %s12, 7
      %p100 = por %p98, %p99
      %p101 = scmp.ne.s32.totalorder %s93, %s96
      %p102 = scmp.eq.s32.totalorder %s12, 0
      %p103 = por %p101, %p102
      %p104 = scmp.ne.s32.totalorder %s93, %s96
      %p105 = scmp.eq.s32.totalorder %s17, 7
      %p106 = por %p104, %p105
      %p107 = scmp.ne.s32.totalorder %s96, %s97
      %p108 = scmp.eq.s32.totalorder %s17, 0
      %p109 = por %p107, %p108
      %p110 = scmp.ne.s32.totalorder %s96, %s97
      %p111 = scmp.eq.s32.totalorder %s18, 7
      %p112 = por %p110, %p111
      %p114 = scmp.ne.s32.totalorder %s97, %s113
      %p115 = scmp.eq.s32.totalorder %s18, 0
      %p116 = por %p114, %p115
      %s117 = ssub.s32 %s19, %s38
      %s118 = ssub.s32 %s20, %s34
      %s119 = sor.u32 %s117, %s118
      %s120 = ssub.s32 %s21, %s30
      %s121 = sor.u32 %s119, %s120
      %p122 = scmp.eq.s32.totalorder %s121, 0
      %s124 = sadd.s32 %s123, 1
      %s125 = scalar_select %p122, %s123, %s124
      %p128 = pneg %p122
      %p129 = scmp.eq.s32.totalorder %s12, 7
      %p130 = por %p128, %p129
      %p131 = scmp.ne.s32.totalorder %s123, %s126
      %p132 = scmp.eq.s32.totalorder %s12, 0
      %p133 = por %p131, %p132
      %p134 = scmp.ne.s32.totalorder %s123, %s126
      %p135 = scmp.eq.s32.totalorder %s17, 7
      %p136 = por %p134, %p135
      %p137 = scmp.ne.s32.totalorder %s126, %s127
      %p138 = scmp.eq.s32.totalorder %s17, 0
      %p139 = por %p137, %p138
      %p140 = scmp.ne.s32.totalorder %s126, %s127
      %p141 = scmp.eq.s32.totalorder %s18, 7
      %p142 = por %p140, %p141
      %p144 = scmp.ne.s32.totalorder %s127, %s143
      %p145 = scmp.eq.s32.totalorder %s18, 0
      %p146 = por %p144, %p145
      %p147 = scmp.le.s32.totalorder 1, %s12
      %p148 = scmp.lt.s32.totalorder %s12, 9
      %p149 = pnand %p147, %p148
      %p150 = pneg %p149
      // Predicated region
      $region9: #{tpu_custom_call.1} parent=5 // pred_check
        _
      $region10: #{tpu_custom_call.1} parent=5 // pred_check_branch
        %152 = sbr.rel (%p149) target = $region12
      $region11: #{tpu_custom_call.1} parent=5 // pred_region
        %s153 = ssub.s32 %s12, 1
      $region12: #{tpu_custom_call.1} parent=5 // pred_fallthru
        _
      %p154 = scmp.lt.s32.totalorder %s12, 8
      // Predicated region
      $region13: #{tpu_custom_call.1} parent=5 // pred_check
        %p155 = pneg %p154
      $region14: #{tpu_custom_call.1} parent=5 // pred_check_branch
        %157 = sbr.rel (%p155) target = $region16
      $region15: #{tpu_custom_call.1} parent=5 // pred_region
        // Predicated region
        $region17: #{tpu_custom_call.1} parent=15 // pred_check
          %p158 = pneg %p51
        $region18: #{tpu_custom_call.1} parent=15 // pred_check_branch
          %160 = sbr.rel (%p158) target = $region20
        $region19: #{tpu_custom_call.1} parent=15 // pred_region
          %p161 = scmp.lt.s32.totalorder %s19, 1
          %s162 = scalar_select %p161, %s19, 1
          %s163 = smul.addr %s162, 32
          %s164 = smul.addr %s163, 4
          %s165 = scalar_lea.vmem %s0, %s164
        $region20: #{tpu_custom_call.1} parent=15 // pred_fallthru
          _
        // Predicated region
        $region21: #{tpu_custom_call.1} parent=15 // pred_check
          %p166 = pneg %p77
        $region22: #{tpu_custom_call.1} parent=15 // pred_check_branch
          %168 = sbr.rel (%p166) target = $region24
        $region23: #{tpu_custom_call.1} parent=15 // pred_region
          %p169 = scmp.lt.s32.totalorder %s20, 1
          %s170 = scalar_select %p169, %s20, 1
          %s171 = smul.addr %s170, 4
          %s172 = smul.addr %s171, 4
          %s173 = scalar_lea.vmem %s1, %s172
        $region24: #{tpu_custom_call.1} parent=15 // pred_fallthru
          _
        // Predicated region
        $region25: #{tpu_custom_call.1} parent=15 // pred_check
          %p174 = pneg %p103
        $region26: #{tpu_custom_call.1} parent=15 // pred_check_branch
          %176 = sbr.rel (%p174) target = $region28
        $region27: #{tpu_custom_call.1} parent=15 // pred_region
          %p177 = scmp.lt.s32.totalorder %s20, 1
          %s178 = scalar_select %p177, %s20, 1
          %s179 = smul.addr %s178, 4
          %s180 = smul.addr %s179, 4
          %s181 = scalar_lea.vmem %s2, %s180
        $region28: #{tpu_custom_call.1} parent=15 // pred_fallthru
          _
      $region16: #{tpu_custom_call.1} parent=5 // pred_fallthru
        _
      %p182 = scmp.le.s32.totalorder 1, %s12
      %p183 = scmp.lt.s32.totalorder %s12, 9
      %p184 = pnand %p182, %p183
      %p185 = pneg %p184
      // Predicated region
      $region29: #{tpu_custom_call.1} parent=5 // pred_check
        _
      $region30: #{tpu_custom_call.1} parent=5 // pred_check_branch
        %187 = sbr.rel (%p184) target = $region32
      $region31: #{tpu_custom_call.1} parent=5 // pred_region
        %s188 = ssub.s32 %s12, 1
        %p189 = scmp.lt.s32.totalorder %s22, 1
        %s190 = scalar_select %p189, %s22, 1
        %s191 = smul.addr %s190, 32
        %s192 = smul.addr %s191, 4
        %s193 = scalar_lea.vmem %s0, %s192
        %p194 = pneg %p57
        %p195 = pneg %p54
        %p196 = scmp.lt.s32.totalorder %s23, 1
        %s197 = scalar_select %p196, %s23, 1
        %s198 = smul.addr %s197, 4
        %s199 = smul.addr %s198, 4
        %s200 = scalar_lea.vmem %s1, %s199
        %p201 = pneg %p83
        %p202 = pneg %p80
        %p203 = scmp.lt.s32.totalorder %s23, 1
        %s204 = scalar_select %p203, %s23, 1
        %s205 = smul.addr %s204, 4
        %s206 = smul.addr %s205, 4
        %s207 = scalar_lea.vmem %s2, %s206
        %p208 = pneg %p109
        %p209 = pneg %p106
        %p210 = pneg %p139
        %p211 = pneg %p136
        %s212 = sand.u32 %s126, 1
        %s213 = scalar_lea.sflag [#allocation4], %s212
        %s214 = sand.u32 %s126, 1
        %s215 = smul.addr %s214, 256
        %s216 = scalar_lea.vmem [#allocation3], %s215
        %p217 = scmp.lt.s32.totalorder %s22, 1
        %s218 = scalar_select %p217, %s22, 1
        %s219 = smul.addr %s218, 32
        %s220 = smul.addr %s219, 4
        %s221 = scalar_lea.vmem %s0, %s220
        %p222 = scmp.lt.s32.totalorder %s23, 1
        %s223 = scalar_select %p222, %s23, 1
        %s224 = smul.addr %s223, 4
        %s225 = smul.addr %s224, 4
        %s226 = scalar_lea.vmem %s1, %s225
        %p227 = scmp.lt.s32.totalorder %s23, 1
        %s228 = scalar_select %p227, %s23, 1
        %s229 = smul.addr %s228, 4
        %s230 = smul.addr %s229, 4
        %s231 = scalar_lea.vmem %s2, %s230
        %s232 = smul.u32 16, %s24
        %p234 = scmp.eq.s32.totalorder %s24, 0
        // Predicated region
        $region33: #{tpu_custom_call.1} parent=31 // pred_check
          %p235 = pneg %p234
        $region34: #{tpu_custom_call.1} parent=31 // pred_check_branch
          %237 = sbr.rel (%p235) target = $region36
        $region35: #{tpu_custom_call.1} parent=31 // pred_region
          %v238 = vld [vmem:[%s221] sm:$0xf]
          %v239 = vld [vmem:[%s221 + $0x4] sm:$0xf]
          %v240 = vld [vmem:[%s221 + $0x8] sm:$0xf]
          %v241 = vld [vmem:[%s221 + $0xc] sm:$0xf]
          %v242 = vld [vmem:[%s221 + $0x10] sm:$0xf]
          %v243 = vld [vmem:[%s221 + $0x14] sm:$0xf]
          %v244 = vld [vmem:[%s221 + $0x18] sm:$0xf]
          %v245 = vld [vmem:[%s221 + $0x1c] sm:$0xf]
          %v246 = vld [vmem:[%s221 + $0x20] sm:$0xf]
          %v247 = vld [vmem:[%s221 + $0x24] sm:$0xf]
          %v248 = vld [vmem:[%s221 + $0x28] sm:$0xf]
          %v249 = vld [vmem:[%s221 + $0x2c] sm:$0xf]
          %v250 = vld [vmem:[%s221 + $0x30] sm:$0xf]
          %v251 = vld [vmem:[%s221 + $0x34] sm:$0xf]
          %v252 = vld [vmem:[%s221 + $0x38] sm:$0xf]
          %v253 = vld [vmem:[%s221 + $0x3c] sm:$0xf]
          %v254 = vld [vmem:[%s221 + $0x40] sm:$0xf]
          %v255 = vld [vmem:[%s221 + $0x44] sm:$0xf]
          %v256 = vld [vmem:[%s221 + $0x48] sm:$0xf]
          %v257 = vld [vmem:[%s221 + $0x4c] sm:$0xf]
          %v258 = vld [vmem:[%s221 + $0x50] sm:$0xf]
          %v259 = vld [vmem:[%s221 + $0x54] sm:$0xf]
          %v260 = vld [vmem:[%s221 + $0x58] sm:$0xf]
          %v261 = vld [vmem:[%s221 + $0x5c] sm:$0xf]
          %v262 = vld [vmem:[%s221 + $0x60] sm:$0xf]
          %v263 = vld [vmem:[%s221 + $0x64] sm:$0xf]
          %v264 = vld [vmem:[%s221 + $0x68] sm:$0xf]
          %v265 = vld [vmem:[%s221 + $0x6c] sm:$0xf]
          %v266 = vld [vmem:[%s221 + $0x70] sm:$0xf]
          %v267 = vld [vmem:[%s221 + $0x74] sm:$0xf]
          %v268 = vld [vmem:[%s221 + $0x78] sm:$0xf]
          %v269 = vld [vmem:[%s221 + $0x7c] sm:$0xf]
          %v270 = vld [vmem:[%s231] sm:$0xf]
          %v271 = vld [vmem:[%s231 + $0x4] sm:$0xf]
          %v272 = vld [vmem:[%s231 + $0x8] sm:$0xf]
          %v273 = vld [vmem:[%s231 + $0xc] sm:$0xf]
          %v306 = vunpack.c.l.b16 %v238
          %v307 = vunpack.c.l.b16 %v239
          %v308 = vunpack.c.l.b16 %v240
          %v309 = vunpack.c.l.b16 %v241
          %v310 = vunpack.c.l.b16 %v242
          %v311 = vunpack.c.l.b16 %v243
          %v312 = vunpack.c.l.b16 %v244
          %v313 = vunpack.c.l.b16 %v245
          %v314 = vunpack.c.l.b16 %v246
          %v315 = vunpack.c.l.b16 %v247
          %v316 = vunpack.c.l.b16 %v248
          %v317 = vunpack.c.l.b16 %v249
          %v318 = vunpack.c.l.b16 %v250
          %v319 = vunpack.c.l.b16 %v251
          %v320 = vunpack.c.l.b16 %v252
          %v321 = vunpack.c.l.b16 %v253
          %v322 = vunpack.c.l.b16 %v254
          %v323 = vunpack.c.l.b16 %v255
          %v324 = vunpack.c.l.b16 %v256
          %v325 = vunpack.c.l.b16 %v257
          %v326 = vunpack.c.l.b16 %v258
          %v327 = vunpack.c.l.b16 %v259
          %v328 = vunpack.c.l.b16 %v260
          %v329 = vunpack.c.l.b16 %v261
          %v330 = vunpack.c.l.b16 %v262
          %v331 = vunpack.c.l.b16 %v263
          %v332 = vunpack.c.l.b16 %v264
          %v333 = vunpack.c.l.b16 %v265
          %v334 = vunpack.c.l.b16 %v266
          %v335 = vunpack.c.l.b16 %v267
          %v336 = vunpack.c.l.b16 %v268
          %v337 = vunpack.c.l.b16 %v269
          %v338 = vpack.c.b16 %v307, %v306
          %v339 = vpack.c.b16 %v309, %v308
          %v340 = vpack.c.b16 %v311, %v310
          %v341 = vpack.c.b16 %v313, %v312
          %v342 = vpack.c.b16 %v315, %v314
          %v343 = vpack.c.b16 %v317, %v316
          %v344 = vpack.c.b16 %v319, %v318
          %v345 = vpack.c.b16 %v321, %v320
          %v346 = vpack.c.b16 %v323, %v322
          %v347 = vpack.c.b16 %v325, %v324
          %v348 = vpack.c.b16 %v327, %v326
          %v349 = vpack.c.b16 %v329, %v328
          %v350 = vpack.c.b16 %v331, %v330
          %v351 = vpack.c.b16 %v333, %v332
          %v352 = vpack.c.b16 %v335, %v334
          %v353 = vpack.c.b16 %v337, %v336
          %v358 = vunpack.c.l.b16 %v270
          %v359 = vunpack.c.l.b16 %v271
          %v360 = vunpack.c.l.b16 %v272
          %v361 = vunpack.c.l.b16 %v273
          %v362 = vpack.c.b16 %v359, %v358
          %v363 = vpack.c.b16 %v361, %v360
          %vm366 = vcmask 261120
          %v368 = vsel %vm366, %v338, 0
          %v371 = vsel %vm366, %v339, 0
          %v374 = vsel %vm366, %v340, 0
          %v377 = vsel %vm366, %v341, 0
          %v380 = vsel %vm366, %v342, 0
          %v383 = vsel %vm366, %v343, 0
          %v386 = vsel %vm366, %v344, 0
          %v389 = vsel %vm366, %v345, 0
          %v392 = vsel %vm366, %v346, 0
          %v395 = vsel %vm366, %v347, 0
          %v398 = vsel %vm366, %v348, 0
          %v401 = vsel %vm366, %v349, 0
          %v404 = vsel %vm366, %v350, 0
          %v407 = vsel %vm366, %v351, 0
          %v410 = vsel %vm366, %v352, 0
          %v413 = vsel %vm366, %v353, 0
          %415 = vmatprep.subr.bf16.mxu0 0
          %416 = vmatpush1.bf16.msra.mxu0 0
          %417 = vmatprep.subr.bf16.mxu0 0
          %418 = vmatpush1.bf16.msra.mxu0 0
          %419 = vmatprep.subr.bf16.mxu0 0
          %420 = vmatpush1.bf16.msra.mxu0 0
          %421 = vmatprep.subr.bf16.mxu0 0
          %422 = vmatpush1.bf16.msra.mxu0 0
          %423 = vmatprep.subr.bf16.mxu0 0
          %424 = vmatpush1.bf16.msra.mxu0 0
          %425 = vmatprep.subr.bf16.mxu0 0
          %426 = vmatpush1.bf16.msra.mxu0 0
          %427 = vmatprep.subr.bf16.mxu0 0
          %428 = vmatpush1.bf16.msra.mxu0 %v363
          %429 = vmatprep.subr.bf16.mxu0 0
          %430 = vmatpush1.bf16.msra.mxu0 %v362
          %431 = vmatprep.subr.bf16.mxu0 0
          %432 = vmatpush2.bf16.msra.mxu0 0
          %433 = vmatprep.subr.bf16.mxu0 0
          %434 = vmatpush2.bf16.msra.mxu0 0
          %435 = vmatprep.subr.bf16.mxu0 0
          %436 = vmatpush2.bf16.msra.mxu0 0
          %437 = vmatprep.subr.bf16.mxu0 0
          %438 = vmatpush2.bf16.msra.mxu0 0
          %439 = vmatprep.subr.bf16.mxu0 0
          %440 = vmatpush2.bf16.msra.mxu0 0
          %441 = vmatprep.subr.bf16.mxu0 0
          %442 = vmatpush2.bf16.msra.mxu0 0
          %443 = vmatprep.subr.bf16.mxu0 0
          %444 = vmatpush2.bf16.msra.mxu0 0
          %445 = vmatprep.subr.bf16.mxu0 0
          %446 = vmatpush2.bf16.msra.mxu0 0
          %447 = vmatprep.mubr.bf16.mxu0 0
          %448 = vmatmul.mubr.bf16.gmra.mxu0 %v368
          %v449 = vpop.f32.mrf.mxu0
          %v450 = vadd.f32 0.0, %v449
          %v451 = vpop.f32.mrf.mxu0
          %v452 = vpop.f32.mrf.mxu0
          %v453 = vadd.f32 0.0, %v452
          %v454 = vpop.f32.mrf.mxu0
          %455 = vmatprep.mubr.bf16.mxu0 0
          %456 = vmatmul.mubr.bf16.gmra.mxu0 %v371
          %v457 = vpop.f32.mrf.mxu0
          %v458 = vadd.f32 0.0, %v457
          %v459 = vpop.f32.mrf.mxu0
          %v460 = vpop.f32.mrf.mxu0
          %v461 = vadd.f32 0.0, %v460
          %v462 = vpop.f32.mrf.mxu0
          %463 = vmatprep.mubr.bf16.mxu0 0
          %464 = vmatmul.mubr.bf16.gmra.mxu0 %v374
          %v465 = vpop.f32.mrf.mxu0
          %v466 = vadd.f32 0.0, %v465
          %v467 = vpop.f32.mrf.mxu0
          %v468 = vpop.f32.mrf.mxu0
          %v469 = vadd.f32 0.0, %v468
          %v470 = vpop.f32.mrf.mxu0
          %471 = vmatprep.mubr.bf16.mxu0 0
          %472 = vmatmul.mubr.bf16.gmra.mxu0 %v377
          %v473 = vpop.f32.mrf.mxu0
          %v474 = vadd.f32 0.0, %v473
          %v475 = vpop.f32.mrf.mxu0
          %v476 = vpop.f32.mrf.mxu0
          %v477 = vadd.f32 0.0, %v476
          %v478 = vpop.f32.mrf.mxu0
          %479 = vmatprep.mubr.bf16.mxu0 0
          %480 = vmatmul.mubr.bf16.gmra.mxu0 %v380
          %v481 = vpop.f32.mrf.mxu0
          %v482 = vadd.f32 0.0, %v481
          %v483 = vpop.f32.mrf.mxu0
          %v484 = vpop.f32.mrf.mxu0
          %v485 = vadd.f32 0.0, %v484
          %v486 = vpop.f32.mrf.mxu0
          %487 = vmatprep.mubr.bf16.mxu0 0
          %488 = vmatmul.mubr.bf16.gmra.mxu0 %v383
          %v489 = vpop.f32.mrf.mxu0
          %v490 = vadd.f32 0.0, %v489
          %v491 = vpop.f32.mrf.mxu0
          %v492 = vpop.f32.mrf.mxu0
          %v493 = vadd.f32 0.0, %v492
          %v494 = vpop.f32.mrf.mxu0
          %495 = vmatprep.mubr.bf16.mxu0 0
          %496 = vmatmul.mubr.bf16.gmra.mxu0 %v386
          %v497 = vpop.f32.mrf.mxu0
          %v498 = vadd.f32 0.0, %v497
          %v499 = vpop.f32.mrf.mxu0
          %v500 = vpop.f32.mrf.mxu0
          %v501 = vadd.f32 0.0, %v500
          %v502 = vpop.f32.mrf.mxu0
          %503 = vmatprep.mubr.bf16.mxu0 0
          %504 = vmatmul.mubr.bf16.gmra.mxu0 %v389
          %v505 = vpop.f32.mrf.mxu0
          %v506 = vadd.f32 0.0, %v505
          %v507 = vpop.f32.mrf.mxu0
          %v508 = vpop.f32.mrf.mxu0
          %v509 = vadd.f32 0.0, %v508
          %v510 = vpop.f32.mrf.mxu0
          %511 = vmatprep.mubr.bf16.mxu0 0
          %512 = vmatmul.mubr.bf16.gmra.mxu0 %v392
          %v513 = vpop.f32.mrf.mxu0
          %v514 = vadd.f32 0.0, %v513
          %v515 = vpop.f32.mrf.mxu0
          %v516 = vpop.f32.mrf.mxu0
          %v517 = vadd.f32 0.0, %v516
          %v518 = vpop.f32.mrf.mxu0
          %519 = vmatprep.mubr.bf16.mxu0 0
          %520 = vmatmul.mubr.bf16.gmra.mxu0 %v395
          %v521 = vpop.f32.mrf.mxu0
          %v522 = vadd.f32 0.0, %v521
          %v523 = vpop.f32.mrf.mxu0
          %v524 = vpop.f32.mrf.mxu0
          %v525 = vadd.f32 0.0, %v524
          %v526 = vpop.f32.mrf.mxu0
          %527 = vmatprep.mubr.bf16.mxu0 0
          %528 = vmatmul.mubr.bf16.gmra.mxu0 %v398
          %v529 = vpop.f32.mrf.mxu0
          %v530 = vadd.f32 0.0, %v529
          %v531 = vpop.f32.mrf.mxu0
          %v532 = vpop.f32.mrf.mxu0
          %v533 = vadd.f32 0.0, %v532
          %v534 = vpop.f32.mrf.mxu0
          %535 = vmatprep.mubr.bf16.mxu0 0
          %536 = vmatmul.mubr.bf16.gmra.mxu0 %v401
          %v537 = vpop.f32.mrf.mxu0
          %v538 = vadd.f32 0.0, %v537
          %v539 = vpop.f32.mrf.mxu0
          %v540 = vpop.f32.mrf.mxu0
          %v541 = vadd.f32 0.0, %v540
          %v542 = vpop.f32.mrf.mxu0
          %543 = vmatprep.mubr.bf16.mxu0 0
          %544 = vmatmul.mubr.bf16.gmra.mxu0 %v404
          %v545 = vpop.f32.mrf.mxu0
          %v546 = vadd.f32 0.0, %v545
          %v547 = vpop.f32.mrf.mxu0
          %v548 = vpop.f32.mrf.mxu0
          %v549 = vadd.f32 0.0, %v548
          %v550 = vpop.f32.mrf.mxu0
          %551 = vmatprep.mubr.bf16.mxu0 0
          %552 = vmatmul.mubr.bf16.gmra.mxu0 %v407
          %v553 = vpop.f32.mrf.mxu0
          %v554 = vadd.f32 0.0, %v553
          %v555 = vpop.f32.mrf.mxu0
          %v556 = vpop.f32.mrf.mxu0
          %v557 = vadd.f32 0.0, %v556
          %v558 = vpop.f32.mrf.mxu0
          %559 = vmatprep.mubr.bf16.mxu0 0
          %560 = vmatmul.mubr.bf16.gmra.mxu0 %v410
          %v561 = vpop.f32.mrf.mxu0
          %v562 = vadd.f32 0.0, %v561
          %v563 = vpop.f32.mrf.mxu0
          %v564 = vpop.f32.mrf.mxu0
          %v565 = vadd.f32 0.0, %v564
          %v566 = vpop.f32.mrf.mxu0
          %567 = vmatprep.mubr.bf16.mxu0 0
          %568 = vmatmul.mubr.bf16.gmra.mxu0 %v413
          %v569 = vpop.f32.mrf.mxu0
          %v570 = vadd.f32 0.0, %v569
          %v571 = vpop.f32.mrf.mxu0
          %v572 = vpop.f32.mrf.mxu0
          %v573 = vadd.f32 0.0, %v572
          %v574 = vpop.f32.mrf.mxu0
          %575 = vdwg.mxu0
          %v576 = vmax.f32 %v450, 0.0
          %v577 = vmax.f32 %v453, 0.0
          %v578 = vmax.f32 %v458, 0.0
          %v579 = vmax.f32 %v461, 0.0
          %v580 = vmax.f32 %v466, 0.0
          %v581 = vmax.f32 %v469, 0.0
          %v582 = vmax.f32 %v474, 0.0
          %v583 = vmax.f32 %v477, 0.0
          %v584 = vmax.f32 %v482, 0.0
          %v585 = vmax.f32 %v485, 0.0
          %v586 = vmax.f32 %v490, 0.0
          %v587 = vmax.f32 %v493, 0.0
          %v588 = vmax.f32 %v498, 0.0
          %v589 = vmax.f32 %v501, 0.0
          %v590 = vmax.f32 %v506, 0.0
          %v591 = vmax.f32 %v509, 0.0
          %v592 = vmax.f32 %v514, 0.0
          %v593 = vmax.f32 %v517, 0.0
          %v594 = vmax.f32 %v522, 0.0
          %v595 = vmax.f32 %v525, 0.0
          %v596 = vmax.f32 %v530, 0.0
          %v597 = vmax.f32 %v533, 0.0
          %v598 = vmax.f32 %v538, 0.0
          %v599 = vmax.f32 %v541, 0.0
          %v600 = vmax.f32 %v546, 0.0
          %v601 = vmax.f32 %v549, 0.0
          %v602 = vmax.f32 %v554, 0.0
          %v603 = vmax.f32 %v557, 0.0
          %v604 = vmax.f32 %v562, 0.0
          %v605 = vmax.f32 %v565, 0.0
          %v606 = vmax.f32 %v570, 0.0
          %v607 = vmax.f32 %v573, 0.0
          %v608 = vpack.c.bf16 %v577, %v576
          %v609 = vpack.c.bf16 %v579, %v578
          %v610 = vpack.c.bf16 %v581, %v580
          %v611 = vpack.c.bf16 %v583, %v582
          %v612 = vpack.c.bf16 %v585, %v584
          %v613 = vpack.c.bf16 %v587, %v586
          %v614 = vpack.c.bf16 %v589, %v588
          %v615 = vpack.c.bf16 %v591, %v590
          %v616 = vpack.c.bf16 %v593, %v592
          %v617 = vpack.c.bf16 %v595, %v594
          %v618 = vpack.c.bf16 %v597, %v596
          %v619 = vpack.c.bf16 %v599, %v598
          %v620 = vpack.c.bf16 %v601, %v600
          %v621 = vpack.c.bf16 %v603, %v602
          %v622 = vpack.c.bf16 %v605, %v604
          %v623 = vpack.c.bf16 %v607, %v606
          %v640 = vunpack.c.l.b16 %v608
          %v641 = vunpack.c.h.b16 %v608
          %v642 = vunpack.c.l.b16 %v609
          %v643 = vunpack.c.h.b16 %v609
          %v644 = vunpack.c.l.b16 %v610
          %v645 = vunpack.c.h.b16 %v610
          %v646 = vunpack.c.l.b16 %v611
          %v647 = vunpack.c.h.b16 %v611
          %v648 = vunpack.c.l.b16 %v612
          %v649 = vunpack.c.h.b16 %v612
          %v650 = vunpack.c.l.b16 %v613
          %v651 = vunpack.c.h.b16 %v613
          %v652 = vunpack.c.l.b16 %v614
          %v653 = vunpack.c.h.b16 %v614
          %v654 = vunpack.c.l.b16 %v615
          %v655 = vunpack.c.h.b16 %v615
          %v656 = vunpack.c.l.b16 %v616
          %v657 = vunpack.c.h.b16 %v616
          %v658 = vunpack.c.l.b16 %v617
          %v659 = vunpack.c.h.b16 %v617
          %v660 = vunpack.c.l.b16 %v618
          %v661 = vunpack.c.h.b16 %v618
          %v662 = vunpack.c.l.b16 %v619
          %v663 = vunpack.c.h.b16 %v619
          %v664 = vunpack.c.l.b16 %v620
          %v665 = vunpack.c.h.b16 %v620
          %v666 = vunpack.c.l.b16 %v621
          %v667 = vunpack.c.h.b16 %v621
          %v668 = vunpack.c.l.b16 %v622
          %v669 = vunpack.c.h.b16 %v622
          %v670 = vunpack.c.l.b16 %v623
          %v671 = vunpack.c.h.b16 %v623
          %v672 = vpack.c.b16 %v640, %v640
          %v673 = vpack.c.b16 %v641, %v641
          %v674 = vpack.c.b16 %v642, %v642
          %v675 = vpack.c.b16 %v643, %v643
          %v676 = vpack.c.b16 %v644, %v644
          %v677 = vpack.c.b16 %v645, %v645
          %v678 = vpack.c.b16 %v646, %v646
          %v679 = vpack.c.b16 %v647, %v647
          %v680 = vpack.c.b16 %v648, %v648
          %v681 = vpack.c.b16 %v649, %v649
          %v682 = vpack.c.b16 %v650, %v650
          %v683 = vpack.c.b16 %v651, %v651
          %v684 = vpack.c.b16 %v652, %v652
          %v685 = vpack.c.b16 %v653, %v653
          %v686 = vpack.c.b16 %v654, %v654
          %v687 = vpack.c.b16 %v655, %v655
          %v688 = vpack.c.b16 %v656, %v656
          %v689 = vpack.c.b16 %v657, %v657
          %v690 = vpack.c.b16 %v658, %v658
          %v691 = vpack.c.b16 %v659, %v659
          %v692 = vpack.c.b16 %v660, %v660
          %v693 = vpack.c.b16 %v661, %v661
          %v694 = vpack.c.b16 %v662, %v662
          %v695 = vpack.c.b16 %v663, %v663
          %v696 = vpack.c.b16 %v664, %v664
          %v697 = vpack.c.b16 %v665, %v665
          %v698 = vpack.c.b16 %v666, %v666
          %v699 = vpack.c.b16 %v667, %v667
          %v700 = vpack.c.b16 %v668, %v668
          %v701 = vpack.c.b16 %v669, %v669
          %v702 = vpack.c.b16 %v670, %v670
          %v703 = vpack.c.b16 %v671, %v671
          %736 = vst [vmem:[#allocation2] sm:$0xf] %v672
          %737 = vst [vmem:[#allocation2 + $0x4] sm:$0xf] %v673
          %738 = vst [vmem:[#allocation2 + $0x8] sm:$0xf] %v674
          %739 = vst [vmem:[#allocation2 + $0xc] sm:$0xf] %v675
          %740 = vst [vmem:[#allocation2 + $0x10] sm:$0xf] %v676
          %741 = vst [vmem:[#allocation2 + $0x14] sm:$0xf] %v677
          %742 = vst [vmem:[#allocation2 + $0x18] sm:$0xf] %v678
          %743 = vst [vmem:[#allocation2 + $0x1c] sm:$0xf] %v679
          %744 = vst [vmem:[#allocation2 + $0x20] sm:$0xf] %v680
          %745 = vst [vmem:[#allocation2 + $0x24] sm:$0xf] %v681
          %746 = vst [vmem:[#allocation2 + $0x28] sm:$0xf] %v682
          %747 = vst [vmem:[#allocation2 + $0x2c] sm:$0xf] %v683
          %748 = vst [vmem:[#allocation2 + $0x30] sm:$0xf] %v684
          %749 = vst [vmem:[#allocation2 + $0x34] sm:$0xf] %v685
          %750 = vst [vmem:[#allocation2 + $0x38] sm:$0xf] %v686
          %751 = vst [vmem:[#allocation2 + $0x3c] sm:$0xf] %v687
          %752 = vst [vmem:[#allocation2 + $0x40] sm:$0xf] %v688
          %753 = vst [vmem:[#allocation2 + $0x44] sm:$0xf] %v689
          %754 = vst [vmem:[#allocation2 + $0x48] sm:$0xf] %v690
          %755 = vst [vmem:[#allocation2 + $0x4c] sm:$0xf] %v691
          %756 = vst [vmem:[#allocation2 + $0x50] sm:$0xf] %v692
          %757 = vst [vmem:[#allocation2 + $0x54] sm:$0xf] %v693
          %758 = vst [vmem:[#allocation2 + $0x58] sm:$0xf] %v694
          %759 = vst [vmem:[#allocation2 + $0x5c] sm:$0xf] %v695
          %760 = vst [vmem:[#allocation2 + $0x60] sm:$0xf] %v696
          %761 = vst [vmem:[#allocation2 + $0x64] sm:$0xf] %v697
          %762 = vst [vmem:[#allocation2 + $0x68] sm:$0xf] %v698
          %763 = vst [vmem:[#allocation2 + $0x6c] sm:$0xf] %v699
          %764 = vst [vmem:[#allocation2 + $0x70] sm:$0xf] %v700
          %765 = vst [vmem:[#allocation2 + $0x74] sm:$0xf] %v701
          %766 = vst [vmem:[#allocation2 + $0x78] sm:$0xf] %v702
          %767 = vst [vmem:[#allocation2 + $0x7c] sm:$0xf] %v703
        $region36: #{tpu_custom_call.1} parent=31 // pred_fallthru
          _
        %s768 = smul.u32 %s24, 128
        %s769 = sshra.s32 %s768, 3
        %s770 = sand.u32 %s768, 7
        %s771 = smul.addr %s769, 4
        %s772 = scalar_lea.vmem %s221, %s771
        %v773 = vld [vmem:[%s772] sm:$0xf]
        %v774 = vld [vmem:[%s772 + $0x4] sm:$0xf]
        %v775 = vld [vmem:[%s772 + $0x8] sm:$0xf]
        %v776 = vld [vmem:[%s772 + $0xc] sm:$0xf]
        %v777 = vld [vmem:[%s772 + $0x10] sm:$0xf]
        %v778 = vld [vmem:[%s772 + $0x14] sm:$0xf]
        %v779 = vld [vmem:[%s772 + $0x18] sm:$0xf]
        %v780 = vld [vmem:[%s772 + $0x1c] sm:$0xf]
        %v781 = vld [vmem:[%s772 + $0x20] sm:$0xf]
        %v782 = vld [vmem:[%s772 + $0x24] sm:$0xf]
        %v783 = vld [vmem:[%s772 + $0x28] sm:$0xf]
        %v784 = vld [vmem:[%s772 + $0x2c] sm:$0xf]
        %v785 = vld [vmem:[%s772 + $0x30] sm:$0xf]
        %v786 = vld [vmem:[%s772 + $0x34] sm:$0xf]
        %v787 = vld [vmem:[%s772 + $0x38] sm:$0xf]
        %v788 = vld [vmem:[%s772 + $0x3c] sm:$0xf]
        %v789 = vld [vmem:[%s226] sm:$0xf]
        %v790 = vld [vmem:[%s226 + $0x4] sm:$0xf]
        %v791 = vld [vmem:[%s226 + $0x8] sm:$0xf]
        %v792 = vld [vmem:[%s226 + $0xc] sm:$0xf]
        %v809 = vunpack.c.l.b16 %v773
        %v810 = vunpack.c.l.b16 %v774
        %v811 = vunpack.c.l.b16 %v775
        %v812 = vunpack.c.l.b16 %v776
        %v813 = vunpack.c.l.b16 %v777
        %v814 = vunpack.c.l.b16 %v778
        %v815 = vunpack.c.l.b16 %v779
        %v816 = vunpack.c.l.b16 %v780
        %v817 = vunpack.c.l.b16 %v781
        %v818 = vunpack.c.l.b16 %v782
        %v819 = vunpack.c.l.b16 %v783
        %v820 = vunpack.c.l.b16 %v784
        %v821 = vunpack.c.l.b16 %v785
        %v822 = vunpack.c.l.b16 %v786
        %v823 = vunpack.c.l.b16 %v787
        %v824 = vunpack.c.l.b16 %v788
        %v825 = vpack.c.b16 %v810, %v809
        %v826 = vpack.c.b16 %v812, %v811
        %v827 = vpack.c.b16 %v814, %v813
        %v828 = vpack.c.b16 %v816, %v815
        %v829 = vpack.c.b16 %v818, %v817
        %v830 = vpack.c.b16 %v820, %v819
        %v831 = vpack.c.b16 %v822, %v821
        %v832 = vpack.c.b16 %v824, %v823
        %v837 = vunpack.c.l.b16 %v789
        %v838 = vunpack.c.l.b16 %v790
        %v839 = vunpack.c.l.b16 %v791
        %v840 = vunpack.c.l.b16 %v792
        %v841 = vpack.c.b16 %v838, %v837
        %v842 = vpack.c.b16 %v840, %v839
        %vm845 = vcmask 261120
        %v847 = vsel %vm845, %v825, 0
        %v850 = vsel %vm845, %v826, 0
        %v853 = vsel %vm845, %v827, 0
        %v856 = vsel %vm845, %v828, 0
        %v859 = vsel %vm845, %v829, 0
        %v862 = vsel %vm845, %v830, 0
        %v865 = vsel %vm845, %v831, 0
        %v868 = vsel %vm845, %v832, 0
        %870 = vmatprep.subr.bf16.mxu0 0
        %871 = vmatpush1.bf16.msra.mxu0 0
        %872 = vmatprep.subr.bf16.mxu0 0
        %873 = vmatpush1.bf16.msra.mxu0 0
        %874 = vmatprep.subr.bf16.mxu0 0
        %875 = vmatpush1.bf16.msra.mxu0 0
        %876 = vmatprep.subr.bf16.mxu0 0
        %877 = vmatpush1.bf16.msra.mxu0 0
        %878 = vmatprep.subr.bf16.mxu0 0
        %879 = vmatpush1.bf16.msra.mxu0 0
        %880 = vmatprep.subr.bf16.mxu0 0
        %881 = vmatpush1.bf16.msra.mxu0 0
        %882 = vmatprep.subr.bf16.mxu0 0
        %883 = vmatpush1.bf16.msra.mxu0 %v842
        %884 = vmatprep.subr.bf16.mxu0 0
        %885 = vmatpush1.bf16.msra.mxu0 %v841
        %886 = vmatprep.subr.bf16.mxu0 0
        %887 = vmatpush2.bf16.msra.mxu0 0
        %888 = vmatprep.subr.bf16.mxu0 0
        %889 = vmatpush2.bf16.msra.mxu0 0
        %890 = vmatprep.subr.bf16.mxu0 0
        %891 = vmatpush2.bf16.msra.mxu0 0
        %892 = vmatprep.subr.bf16.mxu0 0
        %893 = vmatpush2.bf16.msra.mxu0 0
        %894 = vmatprep.subr.bf16.mxu0 0
        %895 = vmatpush2.bf16.msra.mxu0 0
        %896 = vmatprep.subr.bf16.mxu0 0
        %897 = vmatpush2.bf16.msra.mxu0 0
        %898 = vmatprep.subr.bf16.mxu0 0
        %899 = vmatpush2.bf16.msra.mxu0 0
        %900 = vmatprep.subr.bf16.mxu0 0
        %901 = vmatpush2.bf16.msra.mxu0 0
        %902 = vmatprep.mubr.bf16.mxu0 0
        %903 = vmatmul.mubr.bf16.gmra.mxu0 %v847
        %v904 = vpop.f32.mrf.mxu0
        %v905 = vadd.f32 0.0, %v904
        %v906 = vpop.f32.mrf.mxu0
        %v907 = vpop.f32.mrf.mxu0
        %v908 = vadd.f32 0.0, %v907
        %v909 = vpop.f32.mrf.mxu0
        %910 = vmatprep.mubr.bf16.mxu0 0
        %911 = vmatmul.mubr.bf16.gmra.mxu0 %v850
        %v912 = vpop.f32.mrf.mxu0
        %v913 = vadd.f32 0.0, %v912
        %v914 = vpop.f32.mrf.mxu0
        %v915 = vpop.f32.mrf.mxu0
        %v916 = vadd.f32 0.0, %v915
        %v917 = vpop.f32.mrf.mxu0
        %918 = vmatprep.mubr.bf16.mxu0 0
        %919 = vmatmul.mubr.bf16.gmra.mxu0 %v853
        %v920 = vpop.f32.mrf.mxu0
        %v921 = vadd.f32 0.0, %v920
        %v922 = vpop.f32.mrf.mxu0
        %v923 = vpop.f32.mrf.mxu0
        %v924 = vadd.f32 0.0, %v923
        %v925 = vpop.f32.mrf.mxu0
        %926 = vmatprep.mubr.bf16.mxu0 0
        %927 = vmatmul.mubr.bf16.gmra.mxu0 %v856
        %v928 = vpop.f32.mrf.mxu0
        %v929 = vadd.f32 0.0, %v928
        %v930 = vpop.f32.mrf.mxu0
        %v931 = vpop.f32.mrf.mxu0
        %v932 = vadd.f32 0.0, %v931
        %v933 = vpop.f32.mrf.mxu0
        %934 = vmatprep.mubr.bf16.mxu0 0
        %935 = vmatmul.mubr.bf16.gmra.mxu0 %v859
        %v936 = vpop.f32.mrf.mxu0
        %v937 = vadd.f32 0.0, %v936
        %v938 = vpop.f32.mrf.mxu0
        %v939 = vpop.f32.mrf.mxu0
        %v940 = vadd.f32 0.0, %v939
        %v941 = vpop.f32.mrf.mxu0
        %942 = vmatprep.mubr.bf16.mxu0 0
        %943 = vmatmul.mubr.bf16.gmra.mxu0 %v862
        %v944 = vpop.f32.mrf.mxu0
        %v945 = vadd.f32 0.0, %v944
        %v946 = vpop.f32.mrf.mxu0
        %v947 = vpop.f32.mrf.mxu0
        %v948 = vadd.f32 0.0, %v947
        %v949 = vpop.f32.mrf.mxu0
        %950 = vmatprep.mubr.bf16.mxu0 0
        %951 = vmatmul.mubr.bf16.gmra.mxu0 %v865
        %v952 = vpop.f32.mrf.mxu0
        %v953 = vadd.f32 0.0, %v952
        %v954 = vpop.f32.mrf.mxu0
        %v955 = vpop.f32.mrf.mxu0
        %v956 = vadd.f32 0.0, %v955
        %v957 = vpop.f32.mrf.mxu0
        %958 = vmatprep.mubr.bf16.mxu0 0
        %959 = vmatmul.mubr.bf16.gmra.mxu0 %v868
        %v960 = vpop.f32.mrf.mxu0
        %v961 = vadd.f32 0.0, %v960
        %v962 = vpop.f32.mrf.mxu0
        %v963 = vpop.f32.mrf.mxu0
        %v964 = vadd.f32 0.0, %v963
        %v965 = vpop.f32.mrf.mxu0
        %966 = vdwg.mxu0
        %v967 = vmax.f32 %v905, 0.0
        %v968 = vmax.f32 %v908, 0.0
        %v969 = vmax.f32 %v913, 0.0
        %v970 = vmax.f32 %v916, 0.0
        %v971 = vmax.f32 %v921, 0.0
        %v972 = vmax.f32 %v924, 0.0
        %v973 = vmax.f32 %v929, 0.0
        %v974 = vmax.f32 %v932, 0.0
        %v975 = vmax.f32 %v937, 0.0
        %v976 = vmax.f32 %v940, 0.0
        %v977 = vmax.f32 %v945, 0.0
        %v978 = vmax.f32 %v948, 0.0
        %v979 = vmax.f32 %v953, 0.0
        %v980 = vmax.f32 %v956, 0.0
        %v981 = vmax.f32 %v961, 0.0
        %v982 = vmax.f32 %v964, 0.0
        %v983 = vpack.c.bf16 %v968, %v967
        %v984 = vpack.c.bf16 %v970, %v969
        %v985 = vpack.c.bf16 %v972, %v971
        %v986 = vpack.c.bf16 %v974, %v973
        %v987 = vpack.c.bf16 %v976, %v975
        %v988 = vpack.c.bf16 %v978, %v977
        %v989 = vpack.c.bf16 %v980, %v979
        %v990 = vpack.c.bf16 %v982, %v981
        %v991 = vld [vmem:[#allocation2] sm:$0xf]
        %v992 = vld [vmem:[#allocation2 + $0x4] sm:$0xf]
        %v993 = vld [vmem:[#allocation2 + $0x8] sm:$0xf]
        %v994 = vld [vmem:[#allocation2 + $0xc] sm:$0xf]
        %v995 = vld [vmem:[#allocation2 + $0x10] sm:$0xf]
        %v996 = vld [vmem:[#allocation2 + $0x14] sm:$0xf]
        %v997 = vld [vmem:[#allocation2 + $0x18] sm:$0xf]
        %v998 = vld [vmem:[#allocation2 + $0x1c] sm:$0xf]
        %v999 = vld [vmem:[#allocation2 + $0x20] sm:$0xf]
        %v1000 = vld [vmem:[#allocation2 + $0x24] sm:$0xf]
        %v1001 = vld [vmem:[#allocation2 + $0x28] sm:$0xf]
        %v1002 = vld [vmem:[#allocation2 + $0x2c] sm:$0xf]
        %v1003 = vld [vmem:[#allocation2 + $0x30] sm:$0xf]
        %v1004 = vld [vmem:[#allocation2 + $0x34] sm:$0xf]
        %v1005 = vld [vmem:[#allocation2 + $0x38] sm:$0xf]
        %v1006 = vld [vmem:[#allocation2 + $0x3c] sm:$0xf]
        %v1007 = vld [vmem:[#allocation2 + $0x40] sm:$0xf]
        %v1008 = vld [vmem:[#allocation2 + $0x44] sm:$0xf]
        %v1009 = vld [vmem:[#allocation2 + $0x48] sm:$0xf]
        %v1010 = vld [vmem:[#allocation2 + $0x4c] sm:$0xf]
        %v1011 = vld [vmem:[#allocation2 + $0x50] sm:$0xf]
        %v1012 = vld [vmem:[#allocation2 + $0x54] sm:$0xf]
        %v1013 = vld [vmem:[#allocation2 + $0x58] sm:$0xf]
        %v1014 = vld [vmem:[#allocation2 + $0x5c] sm:$0xf]
        %v1015 = vld [vmem:[#allocation2 + $0x60] sm:$0xf]
        %v1016 = vld [vmem:[#allocation2 + $0x64] sm:$0xf]
        %v1017 = vld [vmem:[#allocation2 + $0x68] sm:$0xf]
        %v1018 = vld [vmem:[#allocation2 + $0x6c] sm:$0xf]
        %v1019 = vld [vmem:[#allocation2 + $0x70] sm:$0xf]
        %v1020 = vld [vmem:[#allocation2 + $0x74] sm:$0xf]
        %v1021 = vld [vmem:[#allocation2 + $0x78] sm:$0xf]
        %v1022 = vld [vmem:[#allocation2 + $0x7c] sm:$0xf]
        %v1055 = vunpack.c.l.b16 %v991
        %v1056 = vunpack.c.l.b16 %v992
        %v1057 = vunpack.c.l.b16 %v993
        %v1058 = vunpack.c.l.b16 %v994
        %v1059 = vunpack.c.l.b16 %v995
        %v1060 = vunpack.c.l.b16 %v996
        %v1061 = vunpack.c.l.b16 %v997
        %v1062 = vunpack.c.l.b16 %v998
        %v1063 = vunpack.c.l.b16 %v999
        %v1064 = vunpack.c.l.b16 %v1000
        %v1065 = vunpack.c.l.b16 %v1001
        %v1066 = vunpack.c.l.b16 %v1002
        %v1067 = vunpack.c.l.b16 %v1003
        %v1068 = vunpack.c.l.b16 %v1004
        %v1069 = vunpack.c.l.b16 %v1005
        %v1070 = vunpack.c.l.b16 %v1006
        %v1071 = vunpack.c.l.b16 %v1007
        %v1072 = vunpack.c.l.b16 %v1008
        %v1073 = vunpack.c.l.b16 %v1009
        %v1074 = vunpack.c.l.b16 %v1010
        %v1075 = vunpack.c.l.b16 %v1011
        %v1076 = vunpack.c.l.b16 %v1012
        %v1077 = vunpack.c.l.b16 %v1013
        %v1078 = vunpack.c.l.b16 %v1014
        %v1079 = vunpack.c.l.b16 %v1015
        %v1080 = vunpack.c.l.b16 %v1016
        %v1081 = vunpack.c.l.b16 %v1017
        %v1082 = vunpack.c.l.b16 %v1018
        %v1083 = vunpack.c.l.b16 %v1019
        %v1084 = vunpack.c.l.b16 %v1020
        %v1085 = vunpack.c.l.b16 %v1021
        %v1086 = vunpack.c.l.b16 %v1022
        %v1087 = vpack.c.b16 %v1056, %v1055
        %v1088 = vpack.c.b16 %v1058, %v1057
        %v1089 = vpack.c.b16 %v1060, %v1059
        %v1090 = vpack.c.b16 %v1062, %v1061
        %v1091 = vpack.c.b16 %v1064, %v1063
        %v1092 = vpack.c.b16 %v1066, %v1065
        %v1093 = vpack.c.b16 %v1068, %v1067
        %v1094 = vpack.c.b16 %v1070, %v1069
        %v1095 = vpack.c.b16 %v1072, %v1071
        %v1096 = vpack.c.b16 %v1074, %v1073
        %v1097 = vpack.c.b16 %v1076, %v1075
        %v1098 = vpack.c.b16 %v1078, %v1077
        %v1099 = vpack.c.b16 %v1080, %v1079
        %v1100 = vpack.c.b16 %v1082, %v1081
        %v1101 = vpack.c.b16 %v1084, %v1083
        %v1102 = vpack.c.b16 %v1086, %v1085
        %1119 = vmatprep.subr.bf16.mxu0 0
        %1120 = vmatpush1.bf16.xpose.msra.mxu0 %v1094
        %1121 = vmatprep.subr.bf16.mxu0 0
        %1122 = vmatpush1.bf16.xpose.msra.mxu0 %v1093
        %1123 = vmatprep.subr.bf16.mxu0 0
        %1124 = vmatpush1.bf16.xpose.msra.mxu0 %v1092
        %1125 = vmatprep.subr.bf16.mxu0 0
        %1126 = vmatpush1.bf16.xpose.msra.mxu0 %v1091
        %1127 = vmatprep.subr.bf16.mxu0 0
        %1128 = vmatpush1.bf16.xpose.msra.mxu0 %v1090
        %1129 = vmatprep.subr.bf16.mxu0 0
        %1130 = vmatpush1.bf16.xpose.msra.mxu0 %v1089
        %1131 = vmatprep.subr.bf16.mxu0 0
        %1132 = vmatpush1.bf16.xpose.msra.mxu0 %v1088
        %1133 = vmatprep.subr.bf16.mxu0 0
        %1134 = vmatpush1.bf16.xpose.msra.mxu0 %v1087
        %1135 = vmatprep.subr.bf16.mxu0 0
        %1136 = vmatpush2.bf16.xpose.msra.mxu0 %v1102
        %1137 = vmatprep.subr.bf16.mxu0 0
        %1138 = vmatpush2.bf16.xpose.msra.mxu0 %v1101
        %1139 = vmatprep.subr.bf16.mxu0 0
        %1140 = vmatpush2.bf16.xpose.msra.mxu0 %v1100
        %1141 = vmatprep.subr.bf16.mxu0 0
        %1142 = vmatpush2.bf16.xpose.msra.mxu0 %v1099
        %1143 = vmatprep.subr.bf16.mxu0 0
        %1144 = vmatpush2.bf16.xpose.msra.mxu0 %v1098
        %1145 = vmatprep.subr.bf16.mxu0 0
        %1146 = vmatpush2.bf16.xpose.msra.mxu0 %v1097
        %1147 = vmatprep.subr.bf16.mxu0 0
        %1148 = vmatpush2.bf16.xpose.msra.mxu0 %v1096
        %1149 = vmatprep.subr.bf16.mxu0 0
        %1150 = vmatpush2.bf16.xpose.msra.mxu0 %v1095
        %1151 = vmatprep.mubr.bf16.mxu0 0
        %1152 = vmatmul.mubr.bf16.gmra.mxu0 %v983
        %v1153 = vpop.f32.mrf.mxu0
        %v1154 = vadd.f32 0.0, %v1153
        %v1155 = vpop.f32.mrf.mxu0
        %v1156 = vadd.f32 0.0, %v1155
        %v1157 = vpop.f32.mrf.mxu0
        %v1158 = vadd.f32 0.0, %v1157
        %v1159 = vpop.f32.mrf.mxu0
        %v1160 = vadd.f32 0.0, %v1159
        %1161 = vmatprep.mubr.bf16.mxu0 0
        %1162 = vmatmul.mubr.bf16.gmra.mxu0 %v984
        %v1163 = vpop.f32.mrf.mxu0
        %v1164 = vadd.f32 0.0, %v1163
        %v1165 = vpop.f32.mrf.mxu0
        %v1166 = vadd.f32 0.0, %v1165
        %v1167 = vpop.f32.mrf.mxu0
        %v1168 = vadd.f32 0.0, %v1167
        %v1169 = vpop.f32.mrf.mxu0
        %v1170 = vadd.f32 0.0, %v1169
        %1171 = vmatprep.mubr.bf16.mxu0 0
        %1172 = vmatmul.mubr.bf16.gmra.mxu0 %v985
        %v1173 = vpop.f32.mrf.mxu0
        %v1174 = vadd.f32 0.0, %v1173
        %v1175 = vpop.f32.mrf.mxu0
        %v1176 = vadd.f32 0.0, %v1175
        %v1177 = vpop.f32.mrf.mxu0
        %v1178 = vadd.f32 0.0, %v1177
        %v1179 = vpop.f32.mrf.mxu0
        %v1180 = vadd.f32 0.0, %v1179
        %1181 = vmatprep.mubr.bf16.mxu0 0
        %1182 = vmatmul.mubr.bf16.gmra.mxu0 %v986
        %v1183 = vpop.f32.mrf.mxu0
        %v1184 = vadd.f32 0.0, %v1183
        %v1185 = vpop.f32.mrf.mxu0
        %v1186 = vadd.f32 0.0, %v1185
        %v1187 = vpop.f32.mrf.mxu0
        %v1188 = vadd.f32 0.0, %v1187
        %v1189 = vpop.f32.mrf.mxu0
        %v1190 = vadd.f32 0.0, %v1189
        %1191 = vmatprep.mubr.bf16.mxu0 0
        %1192 = vmatmul.mubr.bf16.gmra.mxu0 %v987
        %v1193 = vpop.f32.mrf.mxu0
        %v1194 = vadd.f32 0.0, %v1193
        %v1195 = vpop.f32.mrf.mxu0
        %v1196 = vadd.f32 0.0, %v1195
        %v1197 = vpop.f32.mrf.mxu0
        %v1198 = vadd.f32 0.0, %v1197
        %v1199 = vpop.f32.mrf.mxu0
        %v1200 = vadd.f32 0.0, %v1199
        %1201 = vmatprep.mubr.bf16.mxu0 0
        %1202 = vmatmul.mubr.bf16.gmra.mxu0 %v988
        %v1203 = vpop.f32.mrf.mxu0
        %v1204 = vadd.f32 0.0, %v1203
        %v1205 = vpop.f32.mrf.mxu0
        %v1206 = vadd.f32 0.0, %v1205
        %v1207 = vpop.f32.mrf.mxu0
        %v1208 = vadd.f32 0.0, %v1207
        %v1209 = vpop.f32.mrf.mxu0
        %v1210 = vadd.f32 0.0, %v1209
        %1211 = vmatprep.mubr.bf16.mxu0 0
        %1212 = vmatmul.mubr.bf16.gmra.mxu0 %v989
        %v1213 = vpop.f32.mrf.mxu0
        %v1214 = vadd.f32 0.0, %v1213
        %v1215 = vpop.f32.mrf.mxu0
        %v1216 = vadd.f32 0.0, %v1215
        %v1217 = vpop.f32.mrf.mxu0
        %v1218 = vadd.f32 0.0, %v1217
        %v1219 = vpop.f32.mrf.mxu0
        %v1220 = vadd.f32 0.0, %v1219
        %1221 = vmatprep.mubr.bf16.mxu0 0
        %1222 = vmatmul.mubr.bf16.gmra.mxu0 %v990
        %v1223 = vpop.f32.mrf.mxu0
        %v1224 = vadd.f32 0.0, %v1223
        %v1225 = vpop.f32.mrf.mxu0
        %v1226 = vadd.f32 0.0, %v1225
        %v1227 = vpop.f32.mrf.mxu0
        %v1228 = vadd.f32 0.0, %v1227
        %v1229 = vpop.f32.mrf.mxu0
        %v1230 = vadd.f32 0.0, %v1229
        %1231 = vdwg.mxu0
        %v1232 = vmax.f32 %v1154, %v1156
        %1233 = vmax.xlane.f32.xlu0 %v1232
        %v1234 = vpop.xlane.xlu0 %1233
        %v1235 = vmax.f32 %v1158, %v1160
        %1236 = vmax.xlane.f32.xlu0 %v1235
        %v1237 = vpop.xlane.xlu0 %1236
        %v1238 = vmax.f32 %v1164, %v1166
        %1239 = vmax.xlane.f32.xlu0 %v1238
        %v1240 = vpop.xlane.xlu0 %1239
        %v1241 = vmax.f32 %v1168, %v1170
        %1242 = vmax.xlane.f32.xlu0 %v1241
        %v1243 = vpop.xlane.xlu0 %1242
        %v1244 = vmax.f32 %v1174, %v1176
        %1245 = vmax.xlane.f32.xlu0 %v1244
        %v1246 = vpop.xlane.xlu0 %1245
        %v1247 = vmax.f32 %v1178, %v1180
        %1248 = vmax.xlane.f32.xlu0 %v1247
        %v1249 = vpop.xlane.xlu0 %1248
        %v1250 = vmax.f32 %v1184, %v1186
        %1251 = vmax.xlane.f32.xlu0 %v1250
        %v1252 = vpop.xlane.xlu0 %1251
        %v1253 = vmax.f32 %v1188, %v1190
        %1254 = vmax.xlane.f32.xlu0 %v1253
        %v1255 = vpop.xlane.xlu0 %1254
        %v1256 = vmax.f32 %v1194, %v1196
        %1257 = vmax.xlane.f32.xlu0 %v1256
        %v1258 = vpop.xlane.xlu0 %1257
        %v1259 = vmax.f32 %v1198, %v1200
        %1260 = vmax.xlane.f32.xlu0 %v1259
        %v1261 = vpop.xlane.xlu0 %1260
        %v1262 = vmax.f32 %v1204, %v1206
        %1263 = vmax.xlane.f32.xlu0 %v1262
        %v1264 = vpop.xlane.xlu0 %1263
        %v1265 = vmax.f32 %v1208, %v1210
        %1266 = vmax.xlane.f32.xlu0 %v1265
        %v1267 = vpop.xlane.xlu0 %1266
        %v1268 = vmax.f32 %v1214, %v1216
        %1269 = vmax.xlane.f32.xlu0 %v1268
        %v1270 = vpop.xlane.xlu0 %1269
        %v1271 = vmax.f32 %v1218, %v1220
        %1272 = vmax.xlane.f32.xlu0 %v1271
        %v1273 = vpop.xlane.xlu0 %1272
        %v1274 = vmax.f32 %v1224, %v1226
        %1275 = vmax.xlane.f32.xlu0 %v1274
        %v1276 = vpop.xlane.xlu0 %1275
        %v1277 = vmax.f32 %v1228, %v1230
        %1278 = vmax.xlane.f32.xlu0 %v1277
        %v1279 = vpop.xlane.xlu0 %1278
        %v1280 = vsub.f32 %v1154, %v1234
        %v1281 = vsub.f32 %v1156, %v1234
        %v1282 = vsub.f32 %v1158, %v1237
        %v1283 = vsub.f32 %v1160, %v1237
        %v1284 = vsub.f32 %v1164, %v1240
        %v1285 = vsub.f32 %v1166, %v1240
        %v1286 = vsub.f32 %v1168, %v1243
        %v1287 = vsub.f32 %v1170, %v1243
        %v1288 = vsub.f32 %v1174, %v1246
        %v1289 = vsub.f32 %v1176, %v1246
        %v1290 = vsub.f32 %v1178, %v1249
        %v1291 = vsub.f32 %v1180, %v1249
        %v1292 = vsub.f32 %v1184, %v1252
        %v1293 = vsub.f32 %v1186, %v1252
        %v1294 = vsub.f32 %v1188, %v1255
        %v1295 = vsub.f32 %v1190, %v1255
        %v1296 = vsub.f32 %v1194, %v1258
        %v1297 = vsub.f32 %v1196, %v1258
        %v1298 = vsub.f32 %v1198, %v1261
        %v1299 = vsub.f32 %v1200, %v1261
        %v1300 = vsub.f32 %v1204, %v1264
        %v1301 = vsub.f32 %v1206, %v1264
        %v1302 = vsub.f32 %v1208, %v1267
        %v1303 = vsub.f32 %v1210, %v1267
        %v1304 = vsub.f32 %v1214, %v1270
        %v1305 = vsub.f32 %v1216, %v1270
        %v1306 = vsub.f32 %v1218, %v1273
        %v1307 = vsub.f32 %v1220, %v1273
        %v1308 = vsub.f32 %v1224, %v1276
        %v1309 = vsub.f32 %v1226, %v1276
        %v1310 = vsub.f32 %v1228, %v1279
        %v1311 = vsub.f32 %v1230, %v1279
        %v1312 = vmul.f32 %v1280, 1.442695
        %v1313 = vpow.pop %v1312
        %v1314 = vmul.f32 %v1281, 1.442695
        %v1315 = vpow.pop %v1314
        %v1316 = vmul.f32 %v1282, 1.442695
        %v1317 = vpow.pop %v1316
        %v1318 = vmul.f32 %v1283, 1.442695
        %v1319 = vpow.pop %v1318
        %v1320 = vmul.f32 %v1284, 1.442695
        %v1321 = vpow.pop %v1320
        %v1322 = vmul.f32 %v1285, 1.442695
        %v1323 = vpow.pop %v1322
        %v1324 = vmul.f32 %v1286, 1.442695
        %v1325 = vpow.pop %v1324
        %v1326 = vmul.f32 %v1287, 1.442695
        %v1327 = vpow.pop %v1326
        %v1328 = vmul.f32 %v1288, 1.442695
        %v1329 = vpow.pop %v1328
        %v1330 = vmul.f32 %v1289, 1.442695
        %v1331 = vpow.pop %v1330
        %v1332 = vmul.f32 %v1290, 1.442695
        %v1333 = vpow.pop %v1332
        %v1334 = vmul.f32 %v1291, 1.442695
        %v1335 = vpow.pop %v1334
        %v1336 = vmul.f32 %v1292, 1.442695
        %v1337 = vpow.pop %v1336
        %v1338 = vmul.f32 %v1293, 1.442695
        %v1339 = vpow.pop %v1338
        %v1340 = vmul.f32 %v1294, 1.442695
        %v1341 = vpow.pop %v1340
        %v1342 = vmul.f32 %v1295, 1.442695
        %v1343 = vpow.pop %v1342
        %v1344 = vmul.f32 %v1296, 1.442695
        %v1345 = vpow.pop %v1344
        %v1346 = vmul.f32 %v1297, 1.442695
        %v1347 = vpow.pop %v1346
        %v1348 = vmul.f32 %v1298, 1.442695
        %v1349 = vpow.pop %v1348
        %v1350 = vmul.f32 %v1299, 1.442695
        %v1351 = vpow.pop %v1350
        %v1352 = vmul.f32 %v1300, 1.442695
        %v1353 = vpow.pop %v1352
        %v1354 = vmul.f32 %v1301, 1.442695
        %v1355 = vpow.pop %v1354
        %v1356 = vmul.f32 %v1302, 1.442695
        %v1357 = vpow.pop %v1356
        %v1358 = vmul.f32 %v1303, 1.442695
        %v1359 = vpow.pop %v1358
        %v1360 = vmul.f32 %v1304, 1.442695
        %v1361 = vpow.pop %v1360
        %v1362 = vmul.f32 %v1305, 1.442695
        %v1363 = vpow.pop %v1362
        %v1364 = vmul.f32 %v1306, 1.442695
        %v1365 = vpow.pop %v1364
        %v1366 = vmul.f32 %v1307, 1.442695
        %v1367 = vpow.pop %v1366
        %v1368 = vmul.f32 %v1308, 1.442695
        %v1369 = vpow.pop %v1368
        %v1370 = vmul.f32 %v1309, 1.442695
        %v1371 = vpow.pop %v1370
        %v1372 = vmul.f32 %v1310, 1.442695
        %v1373 = vpow.pop %v1372
        %v1374 = vmul.f32 %v1311, 1.442695
        %v1375 = vpow.pop %v1374
        %v1376 = vadd.f32 %v1313, %v1315
        %1377 = vadd.xlane.f32.xlu0 %v1376
        %v1378 = vpop.xlane.xlu0 %1377
        %v1379 = vadd.f32 %v1317, %v1319
        %1380 = vadd.xlane.f32.xlu0 %v1379
        %v1381 = vpop.xlane.xlu0 %1380
        %v1382 = vadd.f32 %v1321, %v1323
        %1383 = vadd.xlane.f32.xlu0 %v1382
        %v1384 = vpop.xlane.xlu0 %1383
        %v1385 = vadd.f32 %v1325, %v1327
        %1386 = vadd.xlane.f32.xlu0 %v1385
        %v1387 = vpop.xlane.xlu0 %1386
        %v1388 = vadd.f32 %v1329, %v1331
        %1389 = vadd.xlane.f32.xlu0 %v1388
        %v1390 = vpop.xlane.xlu0 %1389
        %v1391 = vadd.f32 %v1333, %v1335
        %1392 = vadd.xlane.f32.xlu0 %v1391
        %v1393 = vpop.xlane.xlu0 %1392
        %v1394 = vadd.f32 %v1337, %v1339
        %1395 = vadd.xlane.f32.xlu0 %v1394
        %v1396 = vpop.xlane.xlu0 %1395
        %v1397 = vadd.f32 %v1341, %v1343
        %1398 = vadd.xlane.f32.xlu0 %v1397
        %v1399 = vpop.xlane.xlu0 %1398
        %v1400 = vadd.f32 %v1345, %v1347
        %1401 = vadd.xlane.f32.xlu0 %v1400
        %v1402 = vpop.xlane.xlu0 %1401
        %v1403 = vadd.f32 %v1349, %v1351
        %1404 = vadd.xlane.f32.xlu0 %v1403
        %v1405 = vpop.xlane.xlu0 %1404
        %v1406 = vadd.f32 %v1353, %v1355
        %1407 = vadd.xlane.f32.xlu0 %v1406
        %v1408 = vpop.xlane.xlu0 %1407
        %v1409 = vadd.f32 %v1357, %v1359
        %1410 = vadd.xlane.f32.xlu0 %v1409
        %v1411 = vpop.xlane.xlu0 %1410
        %v1412 = vadd.f32 %v1361, %v1363
        %1413 = vadd.xlane.f32.xlu0 %v1412
        %v1414 = vpop.xlane.xlu0 %1413
        %v1415 = vadd.f32 %v1365, %v1367
        %1416 = vadd.xlane.f32.xlu0 %v1415
        %v1417 = vpop.xlane.xlu0 %1416
        %v1418 = vadd.f32 %v1369, %v1371
        %1419 = vadd.xlane.f32.xlu0 %v1418
        %v1420 = vpop.xlane.xlu0 %1419
        %v1421 = vadd.f32 %v1373, %v1375
        %1422 = vadd.xlane.f32.xlu0 %v1421
        %v1423 = vpop.xlane.xlu0 %1422
        %v1424 = vrcp.pop %v1378
        %v1425 = vrcp.pop %v1381
        %v1426 = vrcp.pop %v1384
        %v1427 = vrcp.pop %v1387
        %v1428 = vrcp.pop %v1390
        %v1429 = vrcp.pop %v1393
        %v1430 = vrcp.pop %v1396
        %v1431 = vrcp.pop %v1399
        %v1432 = vrcp.pop %v1402
        %v1433 = vrcp.pop %v1405
        %v1434 = vrcp.pop %v1408
        %v1435 = vrcp.pop %v1411
        %v1436 = vrcp.pop %v1414
        %v1437 = vrcp.pop %v1417
        %v1438 = vrcp.pop %v1420
        %v1439 = vrcp.pop %v1423
        %v1440 = vmul.f32 %v1378, %v1424
        %v1441 = vmul.f32 %v1381, %v1425
        %v1442 = vmul.f32 %v1384, %v1426
        %v1443 = vmul.f32 %v1387, %v1427
        %v1444 = vmul.f32 %v1390, %v1428
        %v1445 = vmul.f32 %v1393, %v1429
        %v1446 = vmul.f32 %v1396, %v1430
        %v1447 = vmul.f32 %v1399, %v1431
        %v1448 = vmul.f32 %v1402, %v1432
        %v1449 = vmul.f32 %v1405, %v1433
        %v1450 = vmul.f32 %v1408, %v1434
        %v1451 = vmul.f32 %v1411, %v1435
        %v1452 = vmul.f32 %v1414, %v1436
        %v1453 = vmul.f32 %v1417, %v1437
        %v1454 = vmul.f32 %v1420, %v1438
        %v1455 = vmul.f32 %v1423, %v1439
        %v1456 = vsub.f32 2.0, %v1440
        %v1457 = vsub.f32 2.0, %v1441
        %v1458 = vsub.f32 2.0, %v1442
        %v1459 = vsub.f32 2.0, %v1443
        %v1460 = vsub.f32 2.0, %v1444
        %v1461 = vsub.f32 2.0, %v1445
        %v1462 = vsub.f32 2.0, %v1446
        %v1463 = vsub.f32 2.0, %v1447
        %v1464 = vsub.f32 2.0, %v1448
        %v1465 = vsub.f32 2.0, %v1449
        %v1466 = vsub.f32 2.0, %v1450
        %v1467 = vsub.f32 2.0, %v1451
        %v1468 = vsub.f32 2.0, %v1452
        %v1469 = vsub.f32 2.0, %v1453
        %v1470 = vsub.f32 2.0, %v1454
        %v1471 = vsub.f32 2.0, %v1455
        %v1472 = vmul.f32 %v1424, %v1456
        %v1473 = vmul.f32 %v1425, %v1457
        %v1474 = vmul.f32 %v1426, %v1458
        %v1475 = vmul.f32 %v1427, %v1459
        %v1476 = vmul.f32 %v1428, %v1460
        %v1477 = vmul.f32 %v1429, %v1461
        %v1478 = vmul.f32 %v1430, %v1462
        %v1479 = vmul.f32 %v1431, %v1463
        %v1480 = vmul.f32 %v1432, %v1464
        %v1481 = vmul.f32 %v1433, %v1465
        %v1482 = vmul.f32 %v1434, %v1466
        %v1483 = vmul.f32 %v1435, %v1467
        %v1484 = vmul.f32 %v1436, %v1468
        %v1485 = vmul.f32 %v1437, %v1469
        %v1486 = vmul.f32 %v1438, %v1470
        %v1487 = vmul.f32 %v1439, %v1471
        %v1488 = vmul.f32 %v1313, %v1472
        %v1489 = vmul.f32 %v1315, %v1472
        %v1490 = vmul.f32 %v1317, %v1473
        %v1491 = vmul.f32 %v1319, %v1473
        %v1492 = vmul.f32 %v1321, %v1474
        %v1493 = vmul.f32 %v1323, %v1474
        %v1494 = vmul.f32 %v1325, %v1475
        %v1495 = vmul.f32 %v1327, %v1475
        %v1496 = vmul.f32 %v1329, %v1476
        %v1497 = vmul.f32 %v1331, %v1476
        %v1498 = vmul.f32 %v1333, %v1477
        %v1499 = vmul.f32 %v1335, %v1477
        %v1500 = vmul.f32 %v1337, %v1478
        %v1501 = vmul.f32 %v1339, %v1478
        %v1502 = vmul.f32 %v1341, %v1479
        %v1503 = vmul.f32 %v1343, %v1479
        %v1504 = vmul.f32 %v1345, %v1480
        %v1505 = vmul.f32 %v1347, %v1480
        %v1506 = vmul.f32 %v1349, %v1481
        %v1507 = vmul.f32 %v1351, %v1481
        %v1508 = vmul.f32 %v1353, %v1482
        %v1509 = vmul.f32 %v1355, %v1482
        %v1510 = vmul.f32 %v1357, %v1483
        %v1511 = vmul.f32 %v1359, %v1483
        %v1512 = vmul.f32 %v1361, %v1484
        %v1513 = vmul.f32 %v1363, %v1484
        %v1514 = vmul.f32 %v1365, %v1485
        %v1515 = vmul.f32 %v1367, %v1485
        %v1516 = vmul.f32 %v1369, %v1486
        %v1517 = vmul.f32 %v1371, %v1486
        %v1518 = vmul.f32 %v1373, %v1487
        %v1519 = vmul.f32 %v1375, %v1487
        %1520 = vst [vmem:[%s216] sm:$0xff] %v1488
        %1521 = vst [vmem:[%s216 + $0x8] sm:$0xff] %v1489
        %1522 = vst [vmem:[%s216 + $0x10] sm:$0xff] %v1490
        %1523 = vst [vmem:[%s216 + $0x18] sm:$0xff] %v1491
        %1524 = vst [vmem:[%s216 + $0x20] sm:$0xff] %v1492
        %1525 = vst [vmem:[%s216 + $0x28] sm:$0xff] %v1493
        %1526 = vst [vmem:[%s216 + $0x30] sm:$0xff] %v1494
        %1527 = vst [vmem:[%s216 + $0x38] sm:$0xff] %v1495
        %1528 = vst [vmem:[%s216 + $0x40] sm:$0xff] %v1496
        %1529 = vst [vmem:[%s216 + $0x48] sm:$0xff] %v1497
        %1530 = vst [vmem:[%s216 + $0x50] sm:$0xff] %v1498
        %1531 = vst [vmem:[%s216 + $0x58] sm:$0xff] %v1499
        %1532 = vst [vmem:[%s216 + $0x60] sm:$0xff] %v1500
        %1533 = vst [vmem:[%s216 + $0x68] sm:$0xff] %v1501
        %1534 = vst [vmem:[%s216 + $0x70] sm:$0xff] %v1502
        %1535 = vst [vmem:[%s216 + $0x78] sm:$0xff] %v1503
        %1536 = vst [vmem:[%s216 + $0x80] sm:$0xff] %v1504
        %1537 = vst [vmem:[%s216 + $0x88] sm:$0xff] %v1505
        %1538 = vst [vmem:[%s216 + $0x90] sm:$0xff] %v1506
        %1539 = vst [vmem:[%s216 + $0x98] sm:$0xff] %v1507
        %1540 = vst [vmem:[%s216 + $0xa0] sm:$0xff] %v1508
        %1541 = vst [vmem:[%s216 + $0xa8] sm:$0xff] %v1509
        %1542 = vst [vmem:[%s216 + $0xb0] sm:$0xff] %v1510
        %1543 = vst [vmem:[%s216 + $0xb8] sm:$0xff] %v1511
        %1544 = vst [vmem:[%s216 + $0xc0] sm:$0xff] %v1512
        %1545 = vst [vmem:[%s216 + $0xc8] sm:$0xff] %v1513
        %1546 = vst [vmem:[%s216 + $0xd0] sm:$0xff] %v1514
        %1547 = vst [vmem:[%s216 + $0xd8] sm:$0xff] %v1515
        %1548 = vst [vmem:[%s216 + $0xe0] sm:$0xff] %v1516
        %1549 = vst [vmem:[%s216 + $0xe8] sm:$0xff] %v1517
        %1550 = vst [vmem:[%s216 + $0xf0] sm:$0xff] %v1518
        %1551 = vst [vmem:[%s216 + $0xf8] sm:$0xff] %v1519
        %s1552 = sand.u32 %s126, 1
        %s1553 = scalar_lea.sflag [#allocation4], %s1552
        %s1554 = sand.u32 %s126, 1
        %s1555 = smul.addr %s1554, 256
        %s1556 = scalar_lea.vmem [#allocation3], %s1555
        // Predicated region
        $region37: #{tpu_custom_call.1} parent=31 // pred_check
          %p1557 = pneg %p136
        $region38: #{tpu_custom_call.1} parent=31 // pred_check_branch
          %1559 = sbr.rel (%p1557) target = $region40
        $region39: #{tpu_custom_call.1} parent=31 // pred_region
          %s1560 = smul.u32 16, %s24
          %s1562 = ssub.s32 4096, 4096
          %1563 = vsyncadd %s1553, %s1562
          %s1564 = smul.addr %s1560, 2
          %s1565 = smul.addr %s23, 64
          %s1566 = sadd.s32 %s1564, %s1565
          %s1567 = smul.addr %s22, 128
          %s1568 = sadd.s32 %s1566, %s1567
          %s1569 = smul.addr %s1568, 128
          %s1570 = scalar_lea.hbm %s3, %s1569
          %s1571 = sshll.u32 %s1556, 4
          %s1572 = int_to_ptr.vmem [resolvable:$true] %s1571
          %1577 = dma.vmem_to_hbm [thread:$0]  %s1572, 4096, %s1570, %s1553, 256, 256, 16
        $region40: #{tpu_custom_call.1} parent=31 // pred_fallthru
          _
      $region32: #{tpu_custom_call.1} parent=5 // pred_fallthru
        _
      %p1578 = scmp.le.s32.totalorder 2, %s12
      // Predicated region
      $region41: #{tpu_custom_call.1} parent=5 // pred_check
        %p1579 = pneg %p1578
      $region42: #{tpu_custom_call.1} parent=5 // pred_check_branch
        %1581 = sbr.rel (%p1579) target = $region44
      $region43: #{tpu_custom_call.1} parent=5 // pred_region
        %s1582 = ssub.s32 %s12, 2
        // Predicated region
        $region45: #{tpu_custom_call.1} parent=43 // pred_check
          %p1583 = pneg %p142
        $region46: #{tpu_custom_call.1} parent=43 // pred_check_branch
          %1585 = sbr.rel (%p1583) target = $region48
        $region47: #{tpu_custom_call.1} parent=43 // pred_region
          %s1586 = sand.u32 %s127, 1
          %s1587 = scalar_lea.sflag [#allocation4], %s1586
          %s1588 = sand.u32 %s127, 1
          %s1589 = smul.addr %s1588, 256
          %s1590 = scalar_lea.vmem [#allocation3], %s1589
          %1591 = dma.done %s1587, 4096
        $region48: #{tpu_custom_call.1} parent=43 // pred_fallthru
          _
      $region44: #{tpu_custom_call.1} parent=5 // pred_fallthru
        _
    $region6: #{tpu_custom_call.1} parent=1 // loop_footer
      %s16 = sadd.s32 1, %s12
    $region7: #{tpu_custom_call.1} parent=1 // loop_footer_branch
      %11 = sbr.rel target = $region3
    $region8: #{tpu_custom_call.1} parent=1 // loop_exit
      _
    %1592 = vsyncpa [#allocation4], 1
    %s1593 = scalar_lea.sflag [#allocation4], 1
    %1594 = vsyncpa %s1593, 1

</llo_original>
